<compile_context>
chip_gen: v7x
topology: tpu7x:2x2x1
jax: 0.10.0
libtpu: 0.0.40
codegen_flags: <defaults>
</compile_context>

<pallas_src>
import math

import jax
import jax.numpy as jnp
from jax import lax
from jax.experimental import pallas as pl
from jax.experimental.pallas import tpu as pltpu


# ----------------------------------------------------------------------------- helpers
def _pick_tile(S, target):
    """Largest tile <= target that divides S and is a multiple of 8 (or S itself)."""
    if S <= target:
        return S
    for t in range(min(target, S), 0, -1):
        if S % t == 0 and t % 8 == 0:
            return t
    return S


def _pad(n, m):
    return -(-n // m) * m


def _tile_bytes(rows, cols, itemsize):
    """VMEM footprint of a 2-D tile after (8, 128) layout padding."""
    return _pad(rows, 8) * _pad(cols, 128) * itemsize


# ----------------------------------------------------------------------------- kernel
def _make_kernel(num_heads, d_k, d_v, tq, tk, masked, shared_kv,
                 dot_dtype, approx_recip):
    D = num_heads * d_k
    cast = jnp.dtype(dot_dtype) != jnp.dtype(jnp.float32)

    def kernel(*refs):
        idx = 0
        if masked:
            length_ref = refs[idx]; idx += 1
        q_ref = refs[idx]; idx += 1
        if shared_kv:
            kv_ref = refs[idx]; idx += 1
        else:
            xk_ref = refs[idx]; idx += 1
            xv_ref = refs[idx]; idx += 1
        wq_ref = refs[idx]; idx += 1
        if shared_kv:
            wkv_ref = refs[idx]; idx += 1
        else:
            wk_ref = refs[idx]; idx += 1
            wv_ref = refs[idx]; idx += 1
        bq_ref = refs[idx]; idx += 1
        if shared_kv:
            bkv_ref = refs[idx]; idx += 1
        else:
            bk_ref = refs[idx]; idx += 1
            bv_ref = refs[idx]; idx += 1
        out_ref = refs[idx]; idx += 1
        qp_ref = refs[idx]; idx += 1
        ctx_refs = refs[idx:idx + num_heads]; idx += num_heads
        den_refs = refs[idx:idx + num_heads]; idx += num_heads

        b = pl.program_id(0)
        ki = pl.program_id(2)
        nk = pl.num_programs(2)

        # --- once per (batch, q-tile): project Q (scale+bias folded on host),
        #     zero the flash-style running accumulators --------------------------
        @pl.when(ki == 0)
        def _init():
            qp = jnp.dot(q_ref[0], wq_ref[...],
                         preferred_element_type=jnp.float32) + bq_ref[...]
            qp_ref[...] = qp.astype(qp_ref.dtype)
            for h in range(num_heads):
                ctx_refs[h][...] = jnp.zeros_like(ctx_refs[h])
                den_refs[h][...] = jnp.zeros_like(den_refs[h])

        # --- per key tile: project K/V, exp-scores, accumulate ctx & denom ------
        def _compute():
            if shared_kv:
                kvp = jnp.dot(kv_ref[0], wkv_ref[...],
                              preferred_element_type=jnp.float32) + bkv_ref[...]
                kp = kvp[:, :D]
                vp = kvp[:, D:]
            else:
                kp = jnp.dot(xk_ref[0], wk_ref[...],
                             preferred_element_type=jnp.float32) + bk_ref[...]
                vp = jnp.dot(xv_ref[0], wv_ref[...],
                             preferred_element_type=jnp.float32) + bv_ref[...]
            if cast:
                kp = kp.astype(dot_dtype)
                vp = vp.astype(dot_dtype)
            if masked:
                key_pos = ki * tk + lax.broadcasted_iota(jnp.int32, (tq, tk), 1)
                mask = (key_pos < length_ref[b]).astype(jnp.float32)

            qp = qp_ref[...]
            for h in range(num_heads):
                qh = qp[:, h * d_k:(h + 1) * d_k]
                kh = kp[:, h * d_k:(h + 1) * d_k]
                vh = vp[:, h * d_v:(h + 1) * d_v]
                # 'qd,kd->qk' contraction — no transposed relayout of K.
                scores = lax.dot_general(qh, kh, (((1,), (1,)), ((), ())),
                                         preferred_element_type=jnp.float32)
                # Reference semantics: exp with NO max subtraction (f32 on EUP).
                scores = jnp.exp(scores)
                if masked:
                    scores = scores * mask       # mask applied after exp, as in module
                den_refs[h][...] += jnp.sum(scores, axis=-1, keepdims=True)
                if cast:
                    scores = scores.astype(dot_dtype)
                ctx_refs[h][...] += jnp.dot(scores, vh,
                                            preferred_element_type=jnp.float32)

        if masked:
            # Valid keys are a prefix (key_pos < length): skip wholly-masked key
            # tiles — saves the exp and the MXU work for the masked fraction.
            pl.when(ki * tk < length_ref[b])(_compute)
        else:
            _compute()

        # --- last key tile: normalize and write the lane-dense output block -----
        @pl.when(ki == nk - 1)
        def _finalize():
            for h in range(num_heads):
                inv = pl.reciprocal(den_refs[h][...] + 1e-8, approx=approx_recip)
                out_ref[0, :, h * d_v:(h + 1) * d_v] = (
                    ctx_refs[h][...] * inv).astype(out_ref.dtype)

    return kernel


# ----------------------------------------------------------------------------- wrapper
def multi_head_self_attention(q, wq, bq, wk, bk, wv, bv, num_heads,
                              k=None, v=None, length=None, *,
                              dot_dtype=jnp.float32, approx_reciprocal=False,
                              tile_q=256, tile_k=256):
    """Pallas TPU implementation of MultiHeadSelfAttention.forward.

    Weights follow PyTorch nn.Linear convention (out_features, in_features); the
    projection is x @ W.T + b.  Returns (B, Sq, d_model) float32.
    dot_dtype=jnp.bfloat16 enables the bf16-MXU fast path (exp/sum/recip stay f32).
    """
    if k is None:
        k = q
    if v is None:
        v = q
    shared_kv = k is v            # K and V projected from the same tensor -> fuse W_K|W_V
    B, Sq, D = q.shape
    Sk = k.shape[1]
    assert v.shape[1] == Sk and k.shape[-1] == D and v.shape[-1] == D
    assert D % num_heads == 0
    d_k = D // num_heads
    d_v = d_k
    inv_scale = 1.0 / math.sqrt(d_k)
    masked = length is not None
    f32 = jnp.float32

    tq = _pick_tile(Sq, tile_q)
    tk = _pick_tile(Sk, tile_k)
    nq, nk = Sq // tq, Sk // tk

    # ---- one-time host relayout: transpose weights, fold 1/sqrt(d_k) into Wq/bq,
    #      fuse K|V weights when shared, cast MXU operands (biases stay f32) ------
    wq_t = (wq.T * inv_scale).astype(dot_dtype)
    bq_r = (bq * inv_scale).reshape(1, D).astype(f32)
    if shared_kv:
        wkv_t = jnp.concatenate([wk.T, wv.T], axis=1).astype(dot_dtype)   # (D, 2D)
        bkv_r = jnp.concatenate([bk, bv]).reshape(1, 2 * D).astype(f32)
    else:
        wk_t = wk.T.astype(dot_dtype)
        wv_t = wv.T.astype(dot_dtype)
        bk_r = bk.reshape(1, D).astype(f32)
        bv_r = bv.reshape(1, D).astype(f32)

    qx = q.astype(dot_dtype)
    kvx = qx if (shared_kv and k is q) else k.astype(dot_dtype)
    if not shared_kv:
        kx = k.astype(dot_dtype)
        vx = v.astype(dot_dtype)

    # ---- BlockSpecs --------------------------------------------------------------
    act_q_map = lambda b, qi, ki, *_: (b, qi, 0)
    act_k_map = lambda b, qi, ki, *_: (b, ki, 0)
    const_map = lambda b, qi, ki, *_: (0, 0)

    def _const_spec(shape):
        # Grid-constant block: the DMA is elided after step 0, so single-buffer it
        # to reclaim the dead second buffer's VMEM.
        try:
            return pl.BlockSpec(shape, const_map, pipeline_mode=pl.Buffered(1))
        except (TypeError, AttributeError):
            return pl.BlockSpec(shape, const_map)

    in_specs = [pl.BlockSpec((1, tq, D), act_q_map)]
    inputs = [qx]
    if shared_kv:
        in_specs += [pl.BlockSpec((1, tk, D), act_k_map),
                     _const_spec((D, D)), _const_spec((D, 2 * D)),
                     _const_spec((1, D)), _const_spec((1, 2 * D))]
        inputs += [kvx, wq_t, wkv_t, bq_r, bkv_r]
    else:
        in_specs += [pl.BlockSpec((1, tk, D), act_k_map),
                     pl.BlockSpec((1, tk, D), act_k_map),
                     _const_spec((D, D)), _const_spec((D, D)), _const_spec((D, D)),
                     _const_spec((1, D)), _const_spec((1, D)), _const_spec((1, D))]
        inputs += [kx, vx, wq_t, wk_t, wv_t, bq_r, bk_r, bv_r]

    scratch_shapes = ([pltpu.VMEM((tq, D), dot_dtype)]                 # projected Q tile
                      + [pltpu.VMEM((tq, d_v), f32)] * num_heads       # running ctx
                      + [pltpu.VMEM((tq, 1), f32)] * num_heads)        # running denom

    # ---- VMEM budget: actual pipeline buffers + in-kernel temporaries, 2x headroom
    dsz = jnp.dtype(dot_dtype).itemsize
    est = (2 * _tile_bytes(tq, D, dsz)                                   # q blocks
           + (1 if shared_kv else 2) * 2 * _tile_bytes(tk, D, dsz)       # k/v blocks
           + 2 * _tile_bytes(tq, D, 4)                                   # out blocks
           + _tile_bytes(D, D, dsz)
           + (_tile_bytes(D, 2 * D, dsz) if shared_kv else 2 * _tile_bytes(D, D, dsz))
           + 3 * _tile_bytes(1, 2 * D, 4)                                # biases
           + _tile_bytes(tq, D, dsz)                                     # qp scratch
           + num_heads * (_tile_bytes(tq, d_v, 4) + _tile_bytes(tq, 1, 4))
           + _tile_bytes(tk, 2 * D, 4)                                   # kvp temp
           + 2 * _tile_bytes(tk, D, dsz)                                 # kp/vp casts
           + 4 * _tile_bytes(tq, tk, 4))                                 # scores/mask
    vmem_limit = int(min(100 * 2 ** 20, max(32 * 2 ** 20, 2 * est)))

    # ---- advisory cost estimate for the XLA scheduler -----------------------------
    flops = int(2 * B * Sq * D * D            # Q projection
                + 4 * B * nq * Sk * D * D     # K/V projections (recomputed per q tile)
                + 4 * B * Sq * Sk * D)        # QK^T + attn@V over all heads
    transcendentals = int(B * num_heads * Sq * Sk)
    bytes_accessed = int(dsz * (B * Sq * D + 2 * B * Sk * D + 3 * D * D)
                         + 4 * (B * Sq * D + 6 * D))
    cost = pl.CostEstimate(flops=flops, transcendentals=transcendentals,
                           bytes_accessed=bytes_accessed)

    kernel = _make_kernel(num_heads, d_k, d_v, tq, tk, masked, shared_kv,
                          dot_dtype, approx_reciprocal)

    grid_spec = pltpu.PrefetchScalarGridSpec(
        num_scalar_prefetch=1 if masked else 0,
        grid=(B, nq, nk),
        in_specs=in_specs,
        out_specs=pl.BlockSpec((1, tq, D), act_q_map),
        scratch_shapes=scratch_shapes,
    )

    call = pl.pallas_call(
        kernel,
        grid_spec=grid_spec,
        out_shape=jax.ShapeDtypeStruct((B, Sq, D), jnp.float32),
        compiler_params=pltpu.CompilerParams(
            dimension_semantics=("parallel", "parallel", "arbitrary"),
            vmem_limit_bytes=vmem_limit),
        cost_estimate=cost,
    )

    if masked:
        return call(length.astype(jnp.int32), *inputs)
    return call(*inputs)


# ----------------------------------------------------------------------------- reference
def reference_mhsa(q, wq, bq, wk, bk, wv, bv, num_heads, k=None, v=None, length=None):
    """Pure-JAX reference mirroring the PyTorch forward."""
    if k is None:
        k = q
    if v is None:
        v = q
    B, Sq, D = q.shape
    Sk = k.shape[1]
    d_k = D // num_heads
    qp = (q @ wq.T + bq).reshape(B, Sq, num_heads, d_k).transpose(0, 2, 1, 3)
    kp = (k @ wk.T + bk).reshape(B, Sk, num_heads, d_k).transpose(0, 2, 1, 3)
    vp = (v @ wv.T + bv).reshape(B, Sk, num_heads, d_k).transpose(0, 2, 1, 3)
    scores = jnp.einsum('bhqd,bhkd->bhqk', qp, kp) / math.sqrt(d_k)
    scores = jnp.exp(scores)
    if length is not None:
        mask = (jnp.arange(Sk)[None, :] < length[:, None]).astype(scores.dtype)
        scores = scores * mask[:, None, None, :]
    attn = scores / (jnp.sum(scores, axis=-1, keepdims=True) + 1e-8)
    ctx = jnp.einsum('bhqk,bhkd->bhqd', attn, vp)
    return ctx.transpose(0, 2, 1, 3).reshape(B, Sq, D)


# ----------------------------------------------------------------------------- tests
if __name__ == "__main__":
    B, S, d_model, num_heads = 2, 8, 32, 4

    key = jax.random.PRNGKey(0)
    (kx, kk2, kv2, kwq, kwk, kwv, kbq, kbk, kbv, kxl) = jax.random.split(key, 10)

    # nn.Linear-shaped params: weight (d_model, d_model) xavier_uniform,
    # bias (d_model,) uniform(-1/sqrt(fan_in), 1/sqrt(fan_in)).
    xav = math.sqrt(6.0 / (d_model + d_model))
    bb = 1.0 / math.sqrt(d_model)
    wq = jax.random.uniform(kwq, (d_model, d_model), jnp.float32, -xav, xav)
    wk = jax.random.uniform(kwk, (d_model, d_model), jnp.float32, -xav, xav)
    wv = jax.random.uniform(kwv, (d_model, d_model), jnp.float32, -xav, xav)
    bq = jax.random.uniform(kbq, (d_model,), jnp.float32, -bb, bb)
    bk = jax.random.uniform(kbk, (d_model,), jnp.float32, -bb, bb)
    bv = jax.random.uniform(kbv, (d_model,), jnp.float32, -bb, bb)

    x = jax.random.normal(kx, (B, S, d_model), jnp.float32)
    xk2 = jax.random.normal(kk2, (B, S, d_model), jnp.float32)
    xv2 = jax.random.normal(kv2, (B, S, d_model), jnp.float32)
    length = jnp.array([S, 5], dtype=jnp.int32)

    # 1) default self-attention (K = V = Q), no mask: fused K|V weights, single tile.
    out = jax.block_until_ready(
        multi_head_self_attention(x, wq, bq, wk, bk, wv, bv, num_heads))
    ref = reference_mhsa(x, wq, bq, wk, bk, wv, bv, num_heads)
    assert out.shape == (B, S, d_model)
    assert jnp.allclose(out, ref, rtol=1e-5, atol=1e-5)

    # 2) length-masked self-attention.
    out_m = jax.block_until_ready(
        multi_head_self_attention(x, wq, bq, wk, bk, wv, bv, num_heads, length=length))
    ref_m = reference_mhsa(x, wq, bq, wk, bk, wv, bv, num_heads, length=length)
    assert jnp.allclose(out_m, ref_m, rtol=1e-5, atol=1e-5)

    # 3) distinct K / V tensors (non-fused weights path), with mask.
    out_c = jax.block_until_ready(
        multi_head_self_attention(x, wq, bq, wk, bk, wv, bv, num_heads,
                                  k=xk2, v=xv2, length=length))
    ref_c = reference_mhsa(x, wq, bq, wk, bk, wv, bv, num_heads,
                           k=xk2, v=xv2, length=length)
    assert jnp.allclose(out_c, ref_c, rtol=1e-5, atol=1e-5)

    # 4) flash-style multi-tile path: longer sequence + forced small tiles so the
    #    grid exercises the running accumulators and fully-masked-tile skipping.
    S2 = 32
    xl = jax.random.normal(kxl, (B, S2, d_model), jnp.float32)
    length2 = jnp.array([S2, 17], dtype=jnp.int32)
    out_t = jax.block_until_ready(
        multi_head_self_attention(xl, wq, bq, wk, bk, wv, bv, num_heads,
                                  length=length2, tile_q=16, tile_k=8))
    ref_t = reference_mhsa(xl, wq, bq, wk, bk, wv, bv, num_heads, length=length2)
    assert jnp.allclose(out_t, ref_t, rtol=1e-5, atol=1e-5)

    # 5) bf16-MXU fast path (v6e/v7x): dot operands in bf16, exp/sum/recip in f32.
    out_b = jax.block_until_ready(
        multi_head_self_attention(xl, wq, bq, wk, bk, wv, bv, num_heads,
                                  length=length2, tile_q=16, tile_k=8,
                                  dot_dtype=jnp.bfloat16))
    assert jnp.allclose(out_b, ref_t, rtol=5e-2, atol=5e-2)

    print("KERNEL_OK")
</pallas_src>

<mosaic_0001>
module attributes {stable_mosaic.version = 11 : i64} {
  func.func @kernel(%arg0: i32, %arg1: i32, %arg2: i32, %arg3: memref<1x8x32xf32, #tpu.memory_space<vmem>>, %arg4: memref<1x8x32xf32, #tpu.memory_space<vmem>>, %arg5: memref<32x32xf32, #tpu.memory_space<vmem>>, %arg6: memref<32x64xf32, #tpu.memory_space<vmem>>, %arg7: memref<1x32xf32, #tpu.memory_space<vmem>>, %arg8: memref<1x64xf32, #tpu.memory_space<vmem>>, %arg9: memref<1x8x32xf32, #tpu.memory_space<vmem>>, %arg10: memref<8x32xf32, #tpu.memory_space<vmem>>, %arg11: memref<8x8xf32, #tpu.memory_space<vmem>>, %arg12: memref<8x8xf32, #tpu.memory_space<vmem>>, %arg13: memref<8x8xf32, #tpu.memory_space<vmem>>, %arg14: memref<8x8xf32, #tpu.memory_space<vmem>>, %arg15: memref<8x1xf32, #tpu.memory_space<vmem>>, %arg16: memref<8x1xf32, #tpu.memory_space<vmem>>, %arg17: memref<8x1xf32, #tpu.memory_space<vmem>>, %arg18: memref<8x1xf32, #tpu.memory_space<vmem>>) attributes {dimension_semantics = [#tpu.dimension_semantics<parallel>, #tpu.dimension_semantics<parallel>, #tpu.dimension_semantics<arbitrary>], iteration_bounds = array<i64: 2, 1, 1>, scalar_prefetch = 0 : i64, scratch_operands = 9 : i64, tpu.core_type = #tpu.core_type<tc>, window_params = [{transform_indices = @transform_0, window_bounds = array<i64: 1, 8, 32>}, {transform_indices = @transform_1, window_bounds = array<i64: 1, 8, 32>}, {pipeline_mode = #tpu.pipeline_mode<synchronous>, transform_indices = @transform_2, window_bounds = array<i64: 32, 32>}, {pipeline_mode = #tpu.pipeline_mode<synchronous>, transform_indices = @transform_3, window_bounds = array<i64: 32, 64>}, {pipeline_mode = #tpu.pipeline_mode<synchronous>, transform_indices = @transform_4, window_bounds = array<i64: 1, 32>}, {pipeline_mode = #tpu.pipeline_mode<synchronous>, transform_indices = @transform_5, window_bounds = array<i64: 1, 64>}, {transform_indices = @transform_6, window_bounds = array<i64: 1, 8, 32>}]} {
    %c0_i32 = arith.constant 0 : i32
    %0 = arith.cmpi eq, %arg2, %c0_i32 : i32
    %1 = arith.extui %0 : i1 to i32
    %c0_i32_0 = arith.constant 0 : i32
    %2 = arith.cmpi ne, %1, %c0_i32_0 : i32
    scf.if %2 {
      %c0_55 = arith.constant 0 : index
      %c0_56 = arith.constant 0 : index
      %c0_57 = arith.constant 0 : index
      %72 = vector.load %arg3[%c0_55, %c0_56, %c0_57] : memref<1x8x32xf32, #tpu.memory_space<vmem>>, vector<1x8x32xf32>
      %73 = vector.shape_cast %72 : vector<1x8x32xf32> to vector<8x32xf32>
      %c0_58 = arith.constant 0 : index
      %c0_59 = arith.constant 0 : index
      %74 = vector.load %arg5[%c0_58, %c0_59] : memref<32x32xf32, #tpu.memory_space<vmem>>, vector<32x32xf32>
      %cst_60 = arith.constant dense<0.000000e+00> : vector<8x32xf32>
      %75 = tpu.matmul %73, %74, %cst_60 {dimension_numbers = #tpu.dot_dimension_numbers<[1], [0], [0], [1], [0, 0, 1, 1], [], []>} : vector<8x32xf32>, vector<32x32xf32>, vector<8x32xf32> -> vector<8x32xf32>
      %c0_61 = arith.constant 0 : index
      %c0_62 = arith.constant 0 : index
      %76 = vector.load %arg7[%c0_61, %c0_62] : memref<1x32xf32, #tpu.memory_space<vmem>>, vector<1x32xf32>
      %77 = vector.broadcast %76 : vector<1x32xf32> to vector<8x32xf32>
      %78 = arith.addf %75, %77 : vector<8x32xf32>
      %c0_63 = arith.constant 0 : index
      %c0_64 = arith.constant 0 : index
      %79 = vector.load %arg10[%c0_63, %c0_64] : memref<8x32xf32, #tpu.memory_space<vmem>>, vector<8x32xf32>
      tpu.vector_store %arg10[%c0_63, %c0_64], %78 {strides = array<i32>} : memref<8x32xf32, #tpu.memory_space<vmem>>, vector<8x32xf32>,
      %cst_65 = arith.constant 0.000000e+00 : f32
      %80 = vector.broadcast %cst_65 : f32 to vector<8x8xf32>
      %c0_66 = arith.constant 0 : index
      %c0_67 = arith.constant 0 : index
      %81 = vector.load %arg11[%c0_66, %c0_67] : memref<8x8xf32, #tpu.memory_space<vmem>>, vector<8x8xf32>
      tpu.vector_store %arg11[%c0_66, %c0_67], %80 {strides = array<i32>} : memref<8x8xf32, #tpu.memory_space<vmem>>, vector<8x8xf32>,
      %cst_68 = arith.constant 0.000000e+00 : f32
      %82 = vector.broadcast %cst_68 : f32 to vector<8x1xf32>
      %c0_69 = arith.constant 0 : index
      %c0_70 = arith.constant 0 : index
      %83 = vector.load %arg15[%c0_69, %c0_70] : memref<8x1xf32, #tpu.memory_space<vmem>>, vector<8x1xf32>
      tpu.vector_store %arg15[%c0_69, %c0_70], %82 {strides = array<i32>} : memref<8x1xf32, #tpu.memory_space<vmem>>, vector<8x1xf32>,
      %cst_71 = arith.constant 0.000000e+00 : f32
      %84 = vector.broadcast %cst_71 : f32 to vector<8x8xf32>
      %c0_72 = arith.constant 0 : index
      %c0_73 = arith.constant 0 : index
      %85 = vector.load %arg12[%c0_72, %c0_73] : memref<8x8xf32, #tpu.memory_space<vmem>>, vector<8x8xf32>
      tpu.vector_store %arg12[%c0_72, %c0_73], %84 {strides = array<i32>} : memref<8x8xf32, #tpu.memory_space<vmem>>, vector<8x8xf32>,
      %cst_74 = arith.constant 0.000000e+00 : f32
      %86 = vector.broadcast %cst_74 : f32 to vector<8x1xf32>
      %c0_75 = arith.constant 0 : index
      %c0_76 = arith.constant 0 : index
      %87 = vector.load %arg16[%c0_75, %c0_76] : memref<8x1xf32, #tpu.memory_space<vmem>>, vector<8x1xf32>
      tpu.vector_store %arg16[%c0_75, %c0_76], %86 {strides = array<i32>} : memref<8x1xf32, #tpu.memory_space<vmem>>, vector<8x1xf32>,
      %cst_77 = arith.constant 0.000000e+00 : f32
      %88 = vector.broadcast %cst_77 : f32 to vector<8x8xf32>
      %c0_78 = arith.constant 0 : index
      %c0_79 = arith.constant 0 : index
      %89 = vector.load %arg13[%c0_78, %c0_79] : memref<8x8xf32, #tpu.memory_space<vmem>>, vector<8x8xf32>
      tpu.vector_store %arg13[%c0_78, %c0_79], %88 {strides = array<i32>} : memref<8x8xf32, #tpu.memory_space<vmem>>, vector<8x8xf32>,
      %cst_80 = arith.constant 0.000000e+00 : f32
      %90 = vector.broadcast %cst_80 : f32 to vector<8x1xf32>
      %c0_81 = arith.constant 0 : index
      %c0_82 = arith.constant 0 : index
      %91 = vector.load %arg17[%c0_81, %c0_82] : memref<8x1xf32, #tpu.memory_space<vmem>>, vector<8x1xf32>
      tpu.vector_store %arg17[%c0_81, %c0_82], %90 {strides = array<i32>} : memref<8x1xf32, #tpu.memory_space<vmem>>, vector<8x1xf32>,
      %cst_83 = arith.constant 0.000000e+00 : f32
      %92 = vector.broadcast %cst_83 : f32 to vector<8x8xf32>
      %c0_84 = arith.constant 0 : index
      %c0_85 = arith.constant 0 : index
      %93 = vector.load %arg14[%c0_84, %c0_85] : memref<8x8xf32, #tpu.memory_space<vmem>>, vector<8x8xf32>
      tpu.vector_store %arg14[%c0_84, %c0_85], %92 {strides = array<i32>} : memref<8x8xf32, #tpu.memory_space<vmem>>, vector<8x8xf32>,
      %cst_86 = arith.constant 0.000000e+00 : f32
      %94 = vector.broadcast %cst_86 : f32 to vector<8x1xf32>
      %c0_87 = arith.constant 0 : index
      %c0_88 = arith.constant 0 : index
      %95 = vector.load %arg18[%c0_87, %c0_88] : memref<8x1xf32, #tpu.memory_space<vmem>>, vector<8x1xf32>
      tpu.vector_store %arg18[%c0_87, %c0_88], %94 {strides = array<i32>} : memref<8x1xf32, #tpu.memory_space<vmem>>, vector<8x1xf32>,
    } else {
    }
    %c0 = arith.constant 0 : index
    %c0_1 = arith.constant 0 : index
    %c0_2 = arith.constant 0 : index
    %3 = vector.load %arg4[%c0, %c0_1, %c0_2] : memref<1x8x32xf32, #tpu.memory_space<vmem>>, vector<1x8x32xf32>
    %4 = vector.shape_cast %3 : vector<1x8x32xf32> to vector<8x32xf32>
    %c0_3 = arith.constant 0 : index
    %c0_4 = arith.constant 0 : index
    %5 = vector.load %arg6[%c0_3, %c0_4] : memref<32x64xf32, #tpu.memory_space<vmem>>, vector<32x64xf32>
    %cst = arith.constant dense<0.000000e+00> : vector<8x64xf32>
    %6 = tpu.matmul %4, %5, %cst {dimension_numbers = #tpu.dot_dimension_numbers<[1], [0], [0], [1], [0, 0, 1, 1], [], []>} : vector<8x32xf32>, vector<32x64xf32>, vector<8x64xf32> -> vector<8x64xf32>
    %c0_5 = arith.constant 0 : index
    %c0_6 = arith.constant 0 : index
    %7 = vector.load %arg8[%c0_5, %c0_6] : memref<1x64xf32, #tpu.memory_space<vmem>>, vector<1x64xf32>
    %8 = vector.broadcast %7 : vector<1x64xf32> to vector<8x64xf32>
    %9 = arith.addf %6, %8 : vector<8x64xf32>
    %10 = vector.extract_strided_slice %9 {offsets = [0, 0], sizes = [8, 32], strides = [1, 1]} : vector<8x64xf32> to vector<8x32xf32>
    %11 = vector.extract_strided_slice %9 {offsets = [0, 32], sizes = [8, 32], strides = [1, 1]} : vector<8x64xf32> to vector<8x32xf32>
    %c0_7 = arith.constant 0 : index
    %c0_8 = arith.constant 0 : index
    %12 = vector.load %arg10[%c0_7, %c0_8] : memref<8x32xf32, #tpu.memory_space<vmem>>, vector<8x32xf32>
    %13 = vector.extract_strided_slice %12 {offsets = [0, 0], sizes = [8, 8], strides = [1, 1]} : vector<8x32xf32> to vector<8x8xf32>
    %14 = vector.extract_strided_slice %10 {offsets = [0, 0], sizes = [8, 8], strides = [1, 1]} : vector<8x32xf32> to vector<8x8xf32>
    %15 = vector.extract_strided_slice %11 {offsets = [0, 0], sizes = [8, 8], strides = [1, 1]} : vector<8x32xf32> to vector<8x8xf32>
    %cst_9 = arith.constant dense<0.000000e+00> : vector<8x8xf32>
    %16 = tpu.matmul %13, %14, %cst_9 {dimension_numbers = #tpu.dot_dimension_numbers<[1], [1], [0], [0], [0, 0, 1, 0], [], []>} : vector<8x8xf32>, vector<8x8xf32>, vector<8x8xf32> -> vector<8x8xf32>
    %17 = math.exp %16 : vector<8x8xf32>
    %c0_10 = arith.constant 0 : index
    %c0_11 = arith.constant 0 : index
    %18 = vector.load %arg15[%c0_10, %c0_11] : memref<8x1xf32, #tpu.memory_space<vmem>>, vector<8x1xf32>
    %cst_12 = arith.constant dense<0.000000e+00> : vector<8xf32>
    %19 = vector.multi_reduction <add>, %17, %cst_12 [1] : vector<8x8xf32> to vector<8xf32>
    %20 = vector.shape_cast %19 : vector<8xf32> to vector<8x1xf32>
    %21 = arith.addf %18, %20 : vector<8x1xf32>
    %c0_13 = arith.constant 0 : index
    %c0_14 = arith.constant 0 : index
    %22 = vector.load %arg15[%c0_13, %c0_14] : memref<8x1xf32, #tpu.memory_space<vmem>>, vector<8x1xf32>
    tpu.vector_store %arg15[%c0_13, %c0_14], %21 {strides = array<i32>} : memref<8x1xf32, #tpu.memory_space<vmem>>, vector<8x1xf32>,
    %c0_15 = arith.constant 0 : index
    %c0_16 = arith.constant 0 : index
    %23 = vector.load %arg11[%c0_15, %c0_16] : memref<8x8xf32, #tpu.memory_space<vmem>>, vector<8x8xf32>
    %cst_17 = arith.constant dense<0.000000e+00> : vector<8x8xf32>
    %24 = tpu.matmul %17, %15, %cst_17 {dimension_numbers = #tpu.dot_dimension_numbers<[1], [0], [0], [1], [0, 0, 1, 1], [], []>} : vector<8x8xf32>, vector<8x8xf32>, vector<8x8xf32> -> vector<8x8xf32>
    %25 = arith.addf %23, %24 : vector<8x8xf32>
    %c0_18 = arith.constant 0 : index
    %c0_19 = arith.constant 0 : index
    %26 = vector.load %arg11[%c0_18, %c0_19] : memref<8x8xf32, #tpu.memory_space<vmem>>, vector<8x8xf32>
    tpu.vector_store %arg11[%c0_18, %c0_19], %25 {strides = array<i32>} : memref<8x8xf32, #tpu.memory_space<vmem>>, vector<8x8xf32>,
    %27 = vector.extract_strided_slice %12 {offsets = [0, 8], sizes = [8, 8], strides = [1, 1]} : vector<8x32xf32> to vector<8x8xf32>
    %28 = vector.extract_strided_slice %10 {offsets = [0, 8], sizes = [8, 8], strides = [1, 1]} : vector<8x32xf32> to vector<8x8xf32>
    %29 = vector.extract_strided_slice %11 {offsets = [0, 8], sizes = [8, 8], strides = [1, 1]} : vector<8x32xf32> to vector<8x8xf32>
    %cst_20 = arith.constant dense<0.000000e+00> : vector<8x8xf32>
    %30 = tpu.matmul %27, %28, %cst_20 {dimension_numbers = #tpu.dot_dimension_numbers<[1], [1], [0], [0], [0, 0, 1, 0], [], []>} : vector<8x8xf32>, vector<8x8xf32>, vector<8x8xf32> -> vector<8x8xf32>
    %31 = math.exp %30 : vector<8x8xf32>
    %c0_21 = arith.constant 0 : index
    %c0_22 = arith.constant 0 : index
    %32 = vector.load %arg16[%c0_21, %c0_22] : memref<8x1xf32, #tpu.memory_space<vmem>>, vector<8x1xf32>
    %cst_23 = arith.constant dense<0.000000e+00> : vector<8xf32>
    %33 = vector.multi_reduction <add>, %31, %cst_23 [1] : vector<8x8xf32> to vector<8xf32>
    %34 = vector.shape_cast %33 : vector<8xf32> to vector<8x1xf32>
    %35 = arith.addf %32, %34 : vector<8x1xf32>
    %c0_24 = arith.constant 0 : index
    %c0_25 = arith.constant 0 : index
    %36 = vector.load %arg16[%c0_24, %c0_25] : memref<8x1xf32, #tpu.memory_space<vmem>>, vector<8x1xf32>
    tpu.vector_store %arg16[%c0_24, %c0_25], %35 {strides = array<i32>} : memref<8x1xf32, #tpu.memory_space<vmem>>, vector<8x1xf32>,
    %c0_26 = arith.constant 0 : index
    %c0_27 = arith.constant 0 : index
    %37 = vector.load %arg12[%c0_26, %c0_27] : memref<8x8xf32, #tpu.memory_space<vmem>>, vector<8x8xf32>
    %cst_28 = arith.constant dense<0.000000e+00> : vector<8x8xf32>
    %38 = tpu.matmul %31, %29, %cst_28 {dimension_numbers = #tpu.dot_dimension_numbers<[1], [0], [0], [1], [0, 0, 1, 1], [], []>} : vector<8x8xf32>, vector<8x8xf32>, vector<8x8xf32> -> vector<8x8xf32>
    %39 = arith.addf %37, %38 : vector<8x8xf32>
    %c0_29 = arith.constant 0 : index
    %c0_30 = arith.constant 0 : index
    %40 = vector.load %arg12[%c0_29, %c0_30] : memref<8x8xf32, #tpu.memory_space<vmem>>, vector<8x8xf32>
    tpu.vector_store %arg12[%c0_29, %c0_30], %39 {strides = array<i32>} : memref<8x8xf32, #tpu.memory_space<vmem>>, vector<8x8xf32>,
    %41 = vector.extract_strided_slice %12 {offsets = [0, 16], sizes = [8, 8], strides = [1, 1]} : vector<8x32xf32> to vector<8x8xf32>
    %42 = vector.extract_strided_slice %10 {offsets = [0, 16], sizes = [8, 8], strides = [1, 1]} : vector<8x32xf32> to vector<8x8xf32>
    %43 = vector.extract_strided_slice %11 {offsets = [0, 16], sizes = [8, 8], strides = [1, 1]} : vector<8x32xf32> to vector<8x8xf32>
    %cst_31 = arith.constant dense<0.000000e+00> : vector<8x8xf32>
    %44 = tpu.matmul %41, %42, %cst_31 {dimension_numbers = #tpu.dot_dimension_numbers<[1], [1], [0], [0], [0, 0, 1, 0], [], []>} : vector<8x8xf32>, vector<8x8xf32>, vector<8x8xf32> -> vector<8x8xf32>
    %45 = math.exp %44 : vector<8x8xf32>
    %c0_32 = arith.constant 0 : index
    %c0_33 = arith.constant 0 : index
    %46 = vector.load %arg17[%c0_32, %c0_33] : memref<8x1xf32, #tpu.memory_space<vmem>>, vector<8x1xf32>
    %cst_34 = arith.constant dense<0.000000e+00> : vector<8xf32>
    %47 = vector.multi_reduction <add>, %45, %cst_34 [1] : vector<8x8xf32> to vector<8xf32>
    %48 = vector.shape_cast %47 : vector<8xf32> to vector<8x1xf32>
    %49 = arith.addf %46, %48 : vector<8x1xf32>
    %c0_35 = arith.constant 0 : index
    %c0_36 = arith.constant 0 : index
    %50 = vector.load %arg17[%c0_35, %c0_36] : memref<8x1xf32, #tpu.memory_space<vmem>>, vector<8x1xf32>
    tpu.vector_store %arg17[%c0_35, %c0_36], %49 {strides = array<i32>} : memref<8x1xf32, #tpu.memory_space<vmem>>, vector<8x1xf32>,
    %c0_37 = arith.constant 0 : index
    %c0_38 = arith.constant 0 : index
    %51 = vector.load %arg13[%c0_37, %c0_38] : memref<8x8xf32, #tpu.memory_space<vmem>>, vector<8x8xf32>
    %cst_39 = arith.constant dense<0.000000e+00> : vector<8x8xf32>
    %52 = tpu.matmul %45, %43, %cst_39 {dimension_numbers = #tpu.dot_dimension_numbers<[1], [0], [0], [1], [0, 0, 1, 1], [], []>} : vector<8x8xf32>, vector<8x8xf32>, vector<8x8xf32> -> vector<8x8xf32>
    %53 = arith.addf %51, %52 : vector<8x8xf32>
    %c0_40 = arith.constant 0 : index
    %c0_41 = arith.constant 0 : index
    %54 = vector.load %arg13[%c0_40, %c0_41] : memref<8x8xf32, #tpu.memory_space<vmem>>, vector<8x8xf32>
    tpu.vector_store %arg13[%c0_40, %c0_41], %53 {strides = array<i32>} : memref<8x8xf32, #tpu.memory_space<vmem>>, vector<8x8xf32>,
    %55 = vector.extract_strided_slice %12 {offsets = [0, 24], sizes = [8, 8], strides = [1, 1]} : vector<8x32xf32> to vector<8x8xf32>
    %56 = vector.extract_strided_slice %10 {offsets = [0, 24], sizes = [8, 8], strides = [1, 1]} : vector<8x32xf32> to vector<8x8xf32>
    %57 = vector.extract_strided_slice %11 {offsets = [0, 24], sizes = [8, 8], strides = [1, 1]} : vector<8x32xf32> to vector<8x8xf32>
    %cst_42 = arith.constant dense<0.000000e+00> : vector<8x8xf32>
    %58 = tpu.matmul %55, %56, %cst_42 {dimension_numbers = #tpu.dot_dimension_numbers<[1], [1], [0], [0], [0, 0, 1, 0], [], []>} : vector<8x8xf32>, vector<8x8xf32>, vector<8x8xf32> -> vector<8x8xf32>
    %59 = math.exp %58 : vector<8x8xf32>
    %c0_43 = arith.constant 0 : index
    %c0_44 = arith.constant 0 : index
    %60 = vector.load %arg18[%c0_43, %c0_44] : memref<8x1xf32, #tpu.memory_space<vmem>>, vector<8x1xf32>
    %cst_45 = arith.constant dense<0.000000e+00> : vector<8xf32>
    %61 = vector.multi_reduction <add>, %59, %cst_45 [1] : vector<8x8xf32> to vector<8xf32>
    %62 = vector.shape_cast %61 : vector<8xf32> to vector<8x1xf32>
    %63 = arith.addf %60, %62 : vector<8x1xf32>
    %c0_46 = arith.constant 0 : index
    %c0_47 = arith.constant 0 : index
    %64 = vector.load %arg18[%c0_46, %c0_47] : memref<8x1xf32, #tpu.memory_space<vmem>>, vector<8x1xf32>
    tpu.vector_store %arg18[%c0_46, %c0_47], %63 {strides = array<i32>} : memref<8x1xf32, #tpu.memory_space<vmem>>, vector<8x1xf32>,
    %c0_48 = arith.constant 0 : index
    %c0_49 = arith.constant 0 : index
    %65 = vector.load %arg14[%c0_48, %c0_49] : memref<8x8xf32, #tpu.memory_space<vmem>>, vector<8x8xf32>
    %cst_50 = arith.constant dense<0.000000e+00> : vector<8x8xf32>
    %66 = tpu.matmul %59, %57, %cst_50 {dimension_numbers = #tpu.dot_dimension_numbers<[1], [0], [0], [1], [0, 0, 1, 1], [], []>} : vector<8x8xf32>, vector<8x8xf32>, vector<8x8xf32> -> vector<8x8xf32>
    %67 = arith.addf %65, %66 : vector<8x8xf32>
    %c0_51 = arith.constant 0 : index
    %c0_52 = arith.constant 0 : index
    %68 = vector.load %arg14[%c0_51, %c0_52] : memref<8x8xf32, #tpu.memory_space<vmem>>, vector<8x8xf32>
    tpu.vector_store %arg14[%c0_51, %c0_52], %67 {strides = array<i32>} : memref<8x8xf32, #tpu.memory_space<vmem>>, vector<8x8xf32>,
    %c0_i32_53 = arith.constant 0 : i32
    %69 = arith.cmpi eq, %arg2, %c0_i32_53 : i32
    %70 = arith.extui %69 : i1 to i32
    %c0_i32_54 = arith.constant 0 : i32
    %71 = arith.cmpi ne, %70, %c0_i32_54 : i32
    scf.if %71 {
      %c0_55 = arith.constant 0 : index
      %c0_56 = arith.constant 0 : index
      %72 = vector.load %arg15[%c0_55, %c0_56] : memref<8x1xf32, #tpu.memory_space<vmem>>, vector<8x1xf32>
      %cst_57 = arith.constant 9.99999993E-9 : f32
      %73 = vector.broadcast %cst_57 : f32 to vector<8x1xf32>
      %74 = arith.addf %72, %73 : vector<8x1xf32>
      %75 = tpu.reciprocal %74 : vector<8x1xf32> -> vector<8x1xf32>
      %c0_58 = arith.constant 0 : index
      %c0_59 = arith.constant 0 : index
      %76 = vector.load %arg11[%c0_58, %c0_59] : memref<8x8xf32, #tpu.memory_space<vmem>>, vector<8x8xf32>
      %77 = vector.broadcast %75 : vector<8x1xf32> to vector<8x8xf32>
      %78 = arith.mulf %76, %77 : vector<8x8xf32>
      %c0_60 = arith.constant 0 : index
      %c0_61 = arith.constant 0 : index
      %c0_62 = arith.constant 0 : index
      %79 = vector.load %arg9[%c0_60, %c0_61, %c0_62] : memref<1x8x32xf32, #tpu.memory_space<vmem>>, vector<1x8x8xf32>
      %80 = vector.shape_cast %79 : vector<1x8x8xf32> to vector<8x8xf32>
      %81 = vector.shape_cast %78 : vector<8x8xf32> to vector<1x8x8xf32>
      tpu.vector_store %arg9[%c0_60, %c0_61, %c0_62], %81 {strides = array<i32>} : memref<1x8x32xf32, #tpu.memory_space<vmem>>, vector<1x8x8xf32>,
      %c0_63 = arith.constant 0 : index
      %c0_64 = arith.constant 0 : index
      %82 = vector.load %arg16[%c0_63, %c0_64] : memref<8x1xf32, #tpu.memory_space<vmem>>, vector<8x1xf32>
      %cst_65 = arith.constant 9.99999993E-9 : f32
      %83 = vector.broadcast %cst_65 : f32 to vector<8x1xf32>
      %84 = arith.addf %82, %83 : vector<8x1xf32>
      %85 = tpu.reciprocal %84 : vector<8x1xf32> -> vector<8x1xf32>
      %c0_66 = arith.constant 0 : index
      %c0_67 = arith.constant 0 : index
      %86 = vector.load %arg12[%c0_66, %c0_67] : memref<8x8xf32, #tpu.memory_space<vmem>>, vector<8x8xf32>
      %87 = vector.broadcast %85 : vector<8x1xf32> to vector<8x8xf32>
      %88 = arith.mulf %86, %87 : vector<8x8xf32>
      %c0_68 = arith.constant 0 : index
      %c0_69 = arith.constant 0 : index
      %c8 = arith.constant 8 : index
      %89 = vector.load %arg9[%c0_68, %c0_69, %c8] : memref<1x8x32xf32, #tpu.memory_space<vmem>>, vector<1x8x8xf32>
      %90 = vector.shape_cast %89 : vector<1x8x8xf32> to vector<8x8xf32>
      %91 = vector.shape_cast %88 : vector<8x8xf32> to vector<1x8x8xf32>
      tpu.vector_store %arg9[%c0_68, %c0_69, %c8], %91 {strides = array<i32>} : memref<1x8x32xf32, #tpu.memory_space<vmem>>, vector<1x8x8xf32>,
      %c0_70 = arith.constant 0 : index
      %c0_71 = arith.constant 0 : index
      %92 = vector.load %arg17[%c0_70, %c0_71] : memref<8x1xf32, #tpu.memory_space<vmem>>, vector<8x1xf32>
      %cst_72 = arith.constant 9.99999993E-9 : f32
      %93 = vector.broadcast %cst_72 : f32 to vector<8x1xf32>
      %94 = arith.addf %92, %93 : vector<8x1xf32>
      %95 = tpu.reciprocal %94 : vector<8x1xf32> -> vector<8x1xf32>
      %c0_73 = arith.constant 0 : index
      %c0_74 = arith.constant 0 : index
      %96 = vector.load %arg13[%c0_73, %c0_74] : memref<8x8xf32, #tpu.memory_space<vmem>>, vector<8x8xf32>
      %97 = vector.broadcast %95 : vector<8x1xf32> to vector<8x8xf32>
      %98 = arith.mulf %96, %97 : vector<8x8xf32>
      %c0_75 = arith.constant 0 : index
      %c0_76 = arith.constant 0 : index
      %c16 = arith.constant 16 : index
      %99 = vector.load %arg9[%c0_75, %c0_76, %c16] : memref<1x8x32xf32, #tpu.memory_space<vmem>>, vector<1x8x8xf32>
      %100 = vector.shape_cast %99 : vector<1x8x8xf32> to vector<8x8xf32>
      %101 = vector.shape_cast %98 : vector<8x8xf32> to vector<1x8x8xf32>
      tpu.vector_store %arg9[%c0_75, %c0_76, %c16], %101 {strides = array<i32>} : memref<1x8x32xf32, #tpu.memory_space<vmem>>, vector<1x8x8xf32>,
      %c0_77 = arith.constant 0 : index
      %c0_78 = arith.constant 0 : index
      %102 = vector.load %arg18[%c0_77, %c0_78] : memref<8x1xf32, #tpu.memory_space<vmem>>, vector<8x1xf32>
      %cst_79 = arith.constant 9.99999993E-9 : f32
      %103 = vector.broadcast %cst_79 : f32 to vector<8x1xf32>
      %104 = arith.addf %102, %103 : vector<8x1xf32>
      %105 = tpu.reciprocal %104 : vector<8x1xf32> -> vector<8x1xf32>
      %c0_80 = arith.constant 0 : index
      %c0_81 = arith.constant 0 : index
      %106 = vector.load %arg14[%c0_80, %c0_81] : memref<8x8xf32, #tpu.memory_space<vmem>>, vector<8x8xf32>
      %107 = vector.broadcast %105 : vector<8x1xf32> to vector<8x8xf32>
      %108 = arith.mulf %106, %107 : vector<8x8xf32>
      %c0_82 = arith.constant 0 : index
      %c0_83 = arith.constant 0 : index
      %c24 = arith.constant 24 : index
      %109 = vector.load %arg9[%c0_82, %c0_83, %c24] : memref<1x8x32xf32, #tpu.memory_space<vmem>>, vector<1x8x8xf32>
      %110 = vector.shape_cast %109 : vector<1x8x8xf32> to vector<8x8xf32>
      %111 = vector.shape_cast %108 : vector<8x8xf32> to vector<1x8x8xf32>
      tpu.vector_store %arg9[%c0_82, %c0_83, %c24], %111 {strides = array<i32>} : memref<1x8x32xf32, #tpu.memory_space<vmem>>, vector<1x8x8xf32>,
    } else {
    }
    return
  }
  func.func @transform_0(%arg0: i32, %arg1: i32, %arg2: i32) -> (i32, i32, i32) {
    %c0_i32 = arith.constant 0 : i32
    %c0_i32_0 = arith.constant 0 : i32
    return %arg0, %arg1, %c0_i32 : i32, i32, i32
  }
  func.func @transform_1(%arg0: i32, %arg1: i32, %arg2: i32) -> (i32, i32, i32) {
    %c0_i32 = arith.constant 0 : i32
    %c0_i32_0 = arith.constant 0 : i32
    return %arg0, %arg2, %c0_i32 : i32, i32, i32
  }
  func.func @transform_2(%arg0: i32, %arg1: i32, %arg2: i32) -> (i32, i32) {
    %c0_i32 = arith.constant 0 : i32
    %c0_i32_0 = arith.constant 0 : i32
    %c0_i32_1 = arith.constant 0 : i32
    return %c0_i32, %c0_i32_0 : i32, i32
  }
  func.func @transform_3(%arg0: i32, %arg1: i32, %arg2: i32) -> (i32, i32) {
    %c0_i32 = arith.constant 0 : i32
    %c0_i32_0 = arith.constant 0 : i32
    %c0_i32_1 = arith.constant 0 : i32
    return %c0_i32, %c0_i32_0 : i32, i32
  }
  func.func @transform_4(%arg0: i32, %arg1: i32, %arg2: i32) -> (i32, i32) {
    %c0_i32 = arith.constant 0 : i32
    %c0_i32_0 = arith.constant 0 : i32
    %c0_i32_1 = arith.constant 0 : i32
    return %c0_i32, %c0_i32_0 : i32, i32
  }
  func.func @transform_5(%arg0: i32, %arg1: i32, %arg2: i32) -> (i32, i32) {
    %c0_i32 = arith.constant 0 : i32
    %c0_i32_0 = arith.constant 0 : i32
    %c0_i32_1 = arith.constant 0 : i32
    return %c0_i32, %c0_i32_0 : i32, i32
  }
  func.func @transform_6(%arg0: i32, %arg1: i32, %arg2: i32) -> (i32, i32, i32) {
    %c0_i32 = arith.constant 0 : i32
    %c0_i32_0 = arith.constant 0 : i32
    return %arg0, %arg1, %c0_i32 : i32, i32, i32
  }
}

</mosaic_0001>

<llo_original>
// kernel: tpu_custom_call.1
$region0: #{tpu_custom_call.1}
  #allocation0 [shape = 'u32[]', space=smem, size = 0x4, offset = 0x4, fixed_abs, tag = 'smem constant byte address 0x4 - core index']
  #allocation1 [shape = 'u32[144,128]{1,0:T(1,128)}', space=vmem, size = 0x12000, scoped, tag = 'internal scratch']
  #allocation2 [shape = 'f32[8,32]{1,0:T(8,128)}', space=vmem, size = 0x1000, scoped, tag = 'scratch operand']
  #allocation3 [shape = 'f32[8,8]{1,0:T(8,128)}', space=vmem, size = 0x1000, scoped, tag = 'scratch operand']
  #allocation4 [shape = 'f32[8,8]{1,0:T(8,128)}', space=vmem, size = 0x1000, scoped, tag = 'scratch operand']
  #allocation5 [shape = 'f32[8,8]{1,0:T(8,128)}', space=vmem, size = 0x1000, scoped, tag = 'scratch operand']
  #allocation6 [shape = 'f32[8,8]{1,0:T(8,128)}', space=vmem, size = 0x1000, scoped, tag = 'scratch operand']
  #allocation7 [shape = 'f32[8,1]{1,0:T(8,128)}', space=vmem, size = 0x1000, scoped, tag = 'scratch operand']
  #allocation8 [shape = 'f32[8,1]{1,0:T(8,128)}', space=vmem, size = 0x1000, scoped, tag = 'scratch operand']
  #allocation9 [shape = 'f32[8,1]{1,0:T(8,128)}', space=vmem, size = 0x1000, scoped, tag = 'scratch operand']
  #allocation10 [shape = 'f32[8,1]{1,0:T(8,128)}', space=vmem, size = 0x1000, scoped, tag = 'scratch operand']
  %s0 = inlined_call_operand.hbm [shape: f32[2,8,32], index: 0, kind: input, shape index: {}]
  %s1 = inlined_call_operand.hbm [shape: f32[2,8,32], index: 1, kind: input, shape index: {}]
  %s2 = inlined_call_operand.hbm [shape: f32[32,32], index: 2, kind: input, shape index: {}]
  %s3 = inlined_call_operand.hbm [shape: f32[32,64], index: 3, kind: input, shape index: {}]
  %s4 = inlined_call_operand.vmem [shape: f32[1,32], index: 4, kind: input, shape index: {}]
  %s5 = inlined_call_operand.vmem [shape: f32[1,64], index: 5, kind: input, shape index: {}]
  %s6 = inlined_call_operand.hbm [shape: f32[2,8,32], index: 6, kind: output, shape index: {}]
  %s7 = sld [smem:[#allocation0]]
  $region81: #{tpu_custom_call.1} parent=0
    _
  %s9 = ssub.s32 1, %s7
  %s10 = scalar_select 0, %s9, %s7
  $region1: #{tpu_custom_call.1} parent=0
    #allocation11 [shape = 'u8[8192]{0}', space=vmem, size = 0x2000, scoped, tag = 'input window, operand 0']
    #allocation12 [shape = 's32[2]{0}', space=sflag, size = 0x8, scoped, tag = 'scoped memory for tpu_custom_call.1']
    #allocation13 [shape = 's32[2]{0}', space=sflag, size = 0x8, scoped, tag = 'scoped memory for tpu_custom_call.1']
    #allocation14 [shape = 'u8[8192]{0}', space=vmem, size = 0x2000, scoped, tag = 'input window, operand 1']
    #allocation15 [shape = 's32[2]{0}', space=sflag, size = 0x8, scoped, tag = 'scoped memory for tpu_custom_call.1']
    #allocation16 [shape = 'u8[16384]{0}', space=vmem, size = 0x4000, scoped, tag = 'input window, operand 2, single buffered']
    #allocation17 [shape = 'u8[16384]{0}', space=vmem, size = 0x4000, scoped, tag = 'input window, operand 3, single buffered']
    #allocation18 [shape = 's32[1]{0}', space=sflag, size = 0x4, scoped, tag = 'scoped memory for tpu_custom_call.1']
    #allocation19 [shape = 'u8[8192]{0}', space=vmem, size = 0x2000, scoped, tag = 'output window, operand 0']
    %11 = vsyncpa [#allocation12], 0
    %s12 = scalar_lea.sflag [#allocation12], 1
    %13 = vsyncpa %s12, 0
    %14 = vsyncpa [#allocation15], 0
    %s15 = scalar_lea.sflag [#allocation15], 1
    %16 = vsyncpa %s15, 0
    %17 = vsyncpa [#allocation18], 0
    %18 = vsyncpa [#allocation13], 0
    %s19 = scalar_lea.sflag [#allocation13], 1
    %20 = vsyncpa %s19, 0
    loop: start=0, step=1, limit=4
    $region2: #{tpu_custom_call.1} parent=1 // loop_pre_header
      _
    $region3: #{tpu_custom_call.1} parent=1 // loop_header
      %s22 = sphi 0, %s26
      %p23 = scmp.ge.s32.totalorder %s22, 4
      %s29 = sphi 0, %s48
      %s30 = sphi 0, %s44
      %s31 = sphi 0, %s40
      %s32 = sphi 0, %s29
      %s33 = sphi 0, %s30
      %s34 = sphi 0, %s31
      %s35 = sphi 0, %s32
      %s36 = sphi 0, %s33
      %s37 = sphi 0, %s34
      %s53 = sphi 0, %s55
      %s56 = sphi 0, %s53
      %s57 = sphi 0, %s56
      %s73 = sphi 0, %s57
      %s81 = sphi 0, %s83
      %s84 = sphi 0, %s81
      %s85 = sphi 0, %s84
      %s101 = sphi 0, %s85
      %s105 = sphi 0, %s105
      %s107 = sphi 0, %s105
      %s108 = sphi 0, %s107
      %s122 = sphi 0, %s108
      %s126 = sphi 0, %s126
      %s128 = sphi 0, %s126
      %s129 = sphi 0, %s128
      %s143 = sphi 0, %s129
      %s147 = sphi 0, %s147
      %s149 = sphi 0, %s147
      %s150 = sphi 0, %s149
      %s164 = sphi 0, %s150
      %s168 = sphi 0, %s168
      %s170 = sphi 0, %s168
      %s171 = sphi 0, %s170
      %s185 = sphi 0, %s171
      %s193 = sphi 0, %s195
      %s196 = sphi 0, %s193
      %s197 = sphi 0, %s196
      %s213 = sphi 0, %s197
    $region4: #{tpu_custom_call.1} parent=1 // loop_header_branch
      %25 = sbr.rel (%p23) target = $region8
    $region5: #{tpu_custom_call.1} parent=1 // loop_body
      %s27 = ssub.s32 %s22, 1
      %s28 = ssub.s32 %s22, 2
      %s38 = sadd.s32 1, %s31
      %p39 = scmp.ge.s32.totalorder %s38, 1
      %s40 = scalar_select %p39, 0, %s38
      %s41 = sadd.s32 1, %s30
      %s42 = scalar_select %p39, %s41, %s30
      %p43 = scmp.ge.s32.totalorder %s42, 1
      %s44 = scalar_select %p43, 0, %s42
      %s45 = sadd.s32 1, %s29
      %s46 = scalar_select %p43, %s45, %s29
      %p47 = scmp.ge.s32.totalorder %s46, 2
      %s48 = scalar_select %p47, 0, %s46
      %s49 = ssub.s32 %s29, %s48
      %s50 = ssub.s32 %s30, %s44
      %s51 = sor.u32 %s49, %s50
      %p52 = scmp.eq.s32.totalorder %s51, 0
      %s54 = sadd.s32 %s53, 1
      %s55 = scalar_select %p52, %s53, %s54
      %p58 = pneg %p52
      %p59 = scmp.eq.s32.totalorder %s22, 1
      %p60 = por %p58, %p59
      %p61 = scmp.ne.s32.totalorder %s53, %s56
      %p62 = scmp.eq.s32.totalorder %s22, 0
      %p63 = por %p61, %p62
      %p64 = scmp.ne.s32.totalorder %s53, %s56
      %p65 = scmp.eq.s32.totalorder %s27, 1
      %p66 = por %p64, %p65
      %p67 = scmp.ne.s32.totalorder %s56, %s57
      %p68 = scmp.eq.s32.totalorder %s27, 0
      %p69 = por %p67, %p68
      %p70 = scmp.ne.s32.totalorder %s56, %s57
      %p71 = scmp.eq.s32.totalorder %s28, 1
      %p72 = por %p70, %p71
      %p74 = scmp.ne.s32.totalorder %s57, %s73
      %p75 = scmp.eq.s32.totalorder %s28, 0
      %p76 = por %p74, %p75
      %s77 = ssub.s32 %s29, %s48
      %s78 = ssub.s32 %s31, %s40
      %s79 = sor.u32 %s77, %s78
      %p80 = scmp.eq.s32.totalorder %s79, 0
      %s82 = sadd.s32 %s81, 1
      %s83 = scalar_select %p80, %s81, %s82
      %p86 = pneg %p80
      %p87 = scmp.eq.s32.totalorder %s22, 1
      %p88 = por %p86, %p87
      %p89 = scmp.ne.s32.totalorder %s81, %s84
      %p90 = scmp.eq.s32.totalorder %s22, 0
      %p91 = por %p89, %p90
      %p92 = scmp.ne.s32.totalorder %s81, %s84
      %p93 = scmp.eq.s32.totalorder %s27, 1
      %p94 = por %p92, %p93
      %p95 = scmp.ne.s32.totalorder %s84, %s85
      %p96 = scmp.eq.s32.totalorder %s27, 0
      %p97 = por %p95, %p96
      %p98 = scmp.ne.s32.totalorder %s84, %s85
      %p99 = scmp.eq.s32.totalorder %s28, 1
      %p100 = por %p98, %p99
      %p102 = scmp.ne.s32.totalorder %s85, %s101
      %p103 = scmp.eq.s32.totalorder %s28, 0
      %p104 = por %p102, %p103
      %s106 = sadd.s32 %s105, 1
      %p109 = scmp.eq.s32.totalorder %s22, 1
      %p110 = scmp.ne.s32.totalorder %s105, %s107
      %p111 = scmp.eq.s32.totalorder %s22, 0
      %p112 = por %p110, %p111
      %p113 = scmp.ne.s32.totalorder %s105, %s107
      %p114 = scmp.eq.s32.totalorder %s27, 1
      %p115 = por %p113, %p114
      %p116 = scmp.ne.s32.totalorder %s107, %s108
      %p117 = scmp.eq.s32.totalorder %s27, 0
      %p118 = por %p116, %p117
      %p119 = scmp.ne.s32.totalorder %s107, %s108
      %p120 = scmp.eq.s32.totalorder %s28, 1
      %p121 = por %p119, %p120
      %p123 = scmp.ne.s32.totalorder %s108, %s122
      %p124 = scmp.eq.s32.totalorder %s28, 0
      %p125 = por %p123, %p124
      %s127 = sadd.s32 %s126, 1
      %p130 = scmp.eq.s32.totalorder %s22, 1
      %p131 = scmp.ne.s32.totalorder %s126, %s128
      %p132 = scmp.eq.s32.totalorder %s22, 0
      %p133 = por %p131, %p132
      %p134 = scmp.ne.s32.totalorder %s126, %s128
      %p135 = scmp.eq.s32.totalorder %s27, 1
      %p136 = por %p134, %p135
      %p137 = scmp.ne.s32.totalorder %s128, %s129
      %p138 = scmp.eq.s32.totalorder %s27, 0
      %p139 = por %p137, %p138
      %p140 = scmp.ne.s32.totalorder %s128, %s129
      %p141 = scmp.eq.s32.totalorder %s28, 1
      %p142 = por %p140, %p141
      %p144 = scmp.ne.s32.totalorder %s129, %s143
      %p145 = scmp.eq.s32.totalorder %s28, 0
      %p146 = por %p144, %p145
      %s148 = sadd.s32 %s147, 1
      %p151 = scmp.eq.s32.totalorder %s22, 1
      %p152 = scmp.ne.s32.totalorder %s147, %s149
      %p153 = scmp.eq.s32.totalorder %s22, 0
      %p154 = por %p152, %p153
      %p155 = scmp.ne.s32.totalorder %s147, %s149
      %p156 = scmp.eq.s32.totalorder %s27, 1
      %p157 = por %p155, %p156
      %p158 = scmp.ne.s32.totalorder %s149, %s150
      %p159 = scmp.eq.s32.totalorder %s27, 0
      %p160 = por %p158, %p159
      %p161 = scmp.ne.s32.totalorder %s149, %s150
      %p162 = scmp.eq.s32.totalorder %s28, 1
      %p163 = por %p161, %p162
      %p165 = scmp.ne.s32.totalorder %s150, %s164
      %p166 = scmp.eq.s32.totalorder %s28, 0
      %p167 = por %p165, %p166
      %s169 = sadd.s32 %s168, 1
      %p172 = scmp.eq.s32.totalorder %s22, 1
      %p173 = scmp.ne.s32.totalorder %s168, %s170
      %p174 = scmp.eq.s32.totalorder %s22, 0
      %p175 = por %p173, %p174
      %p176 = scmp.ne.s32.totalorder %s168, %s170
      %p177 = scmp.eq.s32.totalorder %s27, 1
      %p178 = por %p176, %p177
      %p179 = scmp.ne.s32.totalorder %s170, %s171
      %p180 = scmp.eq.s32.totalorder %s27, 0
      %p181 = por %p179, %p180
      %p182 = scmp.ne.s32.totalorder %s170, %s171
      %p183 = scmp.eq.s32.totalorder %s28, 1
      %p184 = por %p182, %p183
      %p186 = scmp.ne.s32.totalorder %s171, %s185
      %p187 = scmp.eq.s32.totalorder %s28, 0
      %p188 = por %p186, %p187
      %s189 = ssub.s32 %s29, %s48
      %s190 = ssub.s32 %s30, %s44
      %s191 = sor.u32 %s189, %s190
      %p192 = scmp.eq.s32.totalorder %s191, 0
      %s194 = sadd.s32 %s193, 1
      %s195 = scalar_select %p192, %s193, %s194
      %p198 = pneg %p192
      %p199 = scmp.eq.s32.totalorder %s22, 1
      %p200 = por %p198, %p199
      %p201 = scmp.ne.s32.totalorder %s193, %s196
      %p202 = scmp.eq.s32.totalorder %s22, 0
      %p203 = por %p201, %p202
      %p204 = scmp.ne.s32.totalorder %s193, %s196
      %p205 = scmp.eq.s32.totalorder %s27, 1
      %p206 = por %p204, %p205
      %p207 = scmp.ne.s32.totalorder %s196, %s197
      %p208 = scmp.eq.s32.totalorder %s27, 0
      %p209 = por %p207, %p208
      %p210 = scmp.ne.s32.totalorder %s196, %s197
      %p211 = scmp.eq.s32.totalorder %s28, 1
      %p212 = por %p210, %p211
      %p214 = scmp.ne.s32.totalorder %s197, %s213
      %p215 = scmp.eq.s32.totalorder %s28, 0
      %p216 = por %p214, %p215
      %p217 = scmp.le.s32.totalorder 1, %s22
      %p218 = scmp.lt.s32.totalorder %s22, 3
      %p219 = pnand %p217, %p218
      %p220 = pneg %p219
      // Predicated region
      $region9: #{tpu_custom_call.1} parent=5 // pred_check
        _
      $region10: #{tpu_custom_call.1} parent=5 // pred_check_branch
        %222 = sbr.rel (%p219) target = $region12
      $region11: #{tpu_custom_call.1} parent=5 // pred_region
        %s223 = ssub.s32 %s22, 1
        // Predicated region
        $region13: #{tpu_custom_call.1} parent=11 // pred_check
          %p224 = pneg %p118
        $region14: #{tpu_custom_call.1} parent=11 // pred_check_branch
          %226 = sbr.rel (%p224) target = $region16
        $region15: #{tpu_custom_call.1} parent=11 // pred_region
          %s228 = ssub.s32 512, 512
          %229 = vsyncadd [#allocation15], %s228
          %s230 = sshll.u32 [#allocation16], 4
          %s231 = int_to_ptr.vmem [resolvable:$true] %s230
          %236 = dma.hbm_to_vmem [thread:$0]  %s2, 512, %s231, [#allocation15], 128, 128, 8
        $region16: #{tpu_custom_call.1} parent=11 // pred_fallthru
          _
        // Predicated region
        $region17: #{tpu_custom_call.1} parent=11 // pred_check
          %p237 = pneg %p139
        $region18: #{tpu_custom_call.1} parent=11 // pred_check_branch
          %239 = sbr.rel (%p237) target = $region20
        $region19: #{tpu_custom_call.1} parent=11 // pred_region
          %s241 = ssub.s32 512, 512
          %242 = vsyncadd [#allocation18], %s241
          %s243 = sshll.u32 [#allocation17], 4
          %s244 = int_to_ptr.vmem [resolvable:$true] %s243
          %249 = dma.hbm_to_vmem [thread:$0]  %s3, 512, %s244, [#allocation18], 128, 128, 8
        $region20: #{tpu_custom_call.1} parent=11 // pred_fallthru
          _
        // Predicated region
        $region21: #{tpu_custom_call.1} parent=11 // pred_check
          %p250 = pneg %p160
        $region22: #{tpu_custom_call.1} parent=11 // pred_check_branch
          %252 = sbr.rel (%p250) target = $region24
        $region23: #{tpu_custom_call.1} parent=11 // pred_region
          _
        $region24: #{tpu_custom_call.1} parent=11 // pred_fallthru
          _
        // Predicated region
        $region25: #{tpu_custom_call.1} parent=11 // pred_check
          %p253 = pneg %p181
        $region26: #{tpu_custom_call.1} parent=11 // pred_check_branch
          %255 = sbr.rel (%p253) target = $region28
        $region27: #{tpu_custom_call.1} parent=11 // pred_region
          _
        $region28: #{tpu_custom_call.1} parent=11 // pred_fallthru
          _
      $region12: #{tpu_custom_call.1} parent=5 // pred_fallthru
        _
      %p256 = scmp.lt.s32.totalorder %s22, 2
      // Predicated region
      $region29: #{tpu_custom_call.1} parent=5 // pred_check
        %p257 = pneg %p256
      $region30: #{tpu_custom_call.1} parent=5 // pred_check_branch
        %259 = sbr.rel (%p257) target = $region32
      $region31: #{tpu_custom_call.1} parent=5 // pred_region
        // Predicated region
        $region33: #{tpu_custom_call.1} parent=31 // pred_check
          %p260 = pneg %p63
        $region34: #{tpu_custom_call.1} parent=31 // pred_check_branch
          %262 = sbr.rel (%p260) target = $region36
        $region35: #{tpu_custom_call.1} parent=31 // pred_region
          %s263 = sand.u32 %s53, 1
          %s264 = scalar_lea.sflag [#allocation12], %s263
          %s265 = sand.u32 %s53, 1
          %s266 = smul.addr %s265, 8
          %s267 = scalar_lea.vmem [#allocation11], %s266
          %s269 = ssub.s32 128, 128
          %270 = vsyncadd %s264, %s269
          %s271 = sadd.s32 %s30, %s29
          %s272 = smul.addr %s271, 128
          %s273 = scalar_lea.hbm %s0, %s272
          %s275 = sshll.u32 %s267, 4
          %s276 = int_to_ptr.vmem [resolvable:$true] %s275
          %278 = dma.hbm_to_vmem [thread:$0]  %s273, 128, %s276, %s264
        $region36: #{tpu_custom_call.1} parent=31 // pred_fallthru
          _
        // Predicated region
        $region37: #{tpu_custom_call.1} parent=31 // pred_check
          %p279 = pneg %p91
        $region38: #{tpu_custom_call.1} parent=31 // pred_check_branch
          %281 = sbr.rel (%p279) target = $region40
        $region39: #{tpu_custom_call.1} parent=31 // pred_region
          %s282 = sand.u32 %s22, 1
          %s283 = scalar_lea.sflag [#allocation15], %s282
          %s284 = sand.u32 %s81, 1
          %s285 = smul.addr %s284, 8
          %s286 = scalar_lea.vmem [#allocation14], %s285
          %s288 = ssub.s32 128, 128
          %289 = vsyncadd %s283, %s288
          %s290 = sadd.s32 %s31, %s29
          %s291 = smul.addr %s290, 128
          %s292 = scalar_lea.hbm %s1, %s291
          %s294 = sshll.u32 %s286, 4
          %s295 = int_to_ptr.vmem [resolvable:$true] %s294
          %297 = dma.hbm_to_vmem [thread:$0]  %s292, 128, %s295, %s283
        $region40: #{tpu_custom_call.1} parent=31 // pred_fallthru
          _
      $region32: #{tpu_custom_call.1} parent=5 // pred_fallthru
        _
      %p298 = scmp.le.s32.totalorder 1, %s22
      %p299 = scmp.lt.s32.totalorder %s22, 3
      %p300 = pnand %p298, %p299
      %p301 = pneg %p300
      // Predicated region
      $region41: #{tpu_custom_call.1} parent=5 // pred_check
        _
      $region42: #{tpu_custom_call.1} parent=5 // pred_check_branch
        %303 = sbr.rel (%p300) target = $region44
      $region43: #{tpu_custom_call.1} parent=5 // pred_region
        %s304 = ssub.s32 %s22, 1
        %s305 = sand.u32 %s56, 1
        %s306 = scalar_lea.sflag [#allocation12], %s305
        %s307 = sand.u32 %s56, 1
        %s308 = smul.addr %s307, 8
        %s309 = scalar_lea.vmem [#allocation11], %s308
        // Predicated region
        $region45: #{tpu_custom_call.1} parent=43 // pred_check
          %p310 = pneg %p69
        $region46: #{tpu_custom_call.1} parent=43 // pred_check_branch
          %312 = sbr.rel (%p310) target = $region48
        $region47: #{tpu_custom_call.1} parent=43 // pred_region
          %313 = dma.done %s306, 128
        $region48: #{tpu_custom_call.1} parent=43 // pred_fallthru
          _
        %s314 = sand.u32 %s27, 1
        %s315 = scalar_lea.sflag [#allocation15], %s314
        %s316 = sand.u32 %s84, 1
        %s317 = smul.addr %s316, 8
        %s318 = scalar_lea.vmem [#allocation14], %s317
        // Predicated region
        $region49: #{tpu_custom_call.1} parent=43 // pred_check
          %p319 = pneg %p97
        $region50: #{tpu_custom_call.1} parent=43 // pred_check_branch
          %321 = sbr.rel (%p319) target = $region52
        $region51: #{tpu_custom_call.1} parent=43 // pred_region
          %322 = dma.done %s315, 128
        $region52: #{tpu_custom_call.1} parent=43 // pred_fallthru
          _
        // Predicated region
        $region53: #{tpu_custom_call.1} parent=43 // pred_check
          %p323 = pneg %p118
        $region54: #{tpu_custom_call.1} parent=43 // pred_check_branch
          %325 = sbr.rel (%p323) target = $region56
        $region55: #{tpu_custom_call.1} parent=43 // pred_region
          %326 = dma.done [#allocation15], 512
        $region56: #{tpu_custom_call.1} parent=43 // pred_fallthru
          _
        // Predicated region
        $region57: #{tpu_custom_call.1} parent=43 // pred_check
          %p327 = pneg %p139
        $region58: #{tpu_custom_call.1} parent=43 // pred_check_branch
          %329 = sbr.rel (%p327) target = $region60
        $region59: #{tpu_custom_call.1} parent=43 // pred_region
          %330 = dma.done [#allocation18], 512
        $region60: #{tpu_custom_call.1} parent=43 // pred_fallthru
          _
        %s331 = sand.u32 %s56, 1
        %s332 = scalar_lea.sflag [#allocation12], %s331
        %s333 = sand.u32 %s56, 1
        %s334 = smul.addr %s333, 8
        %s335 = scalar_lea.vmem [#allocation11], %s334
        %p336 = pneg %p69
        %p337 = pneg %p66
        %s338 = sand.u32 %s27, 1
        %s339 = scalar_lea.sflag [#allocation15], %s338
        %s340 = sand.u32 %s84, 1
        %s341 = smul.addr %s340, 8
        %s342 = scalar_lea.vmem [#allocation14], %s341
        %p343 = pneg %p97
        %p344 = pneg %p94
        %p345 = pneg %p118
        %p346 = pneg %p115
        %p347 = pneg %p139
        %p348 = pneg %p136
        %p349 = pneg %p160
        %p350 = pneg %p157
        %p351 = pneg %p181
        %p352 = pneg %p178
        %p353 = pneg %p209
        %p354 = pneg %p206
        %s355 = sand.u32 %s196, 1
        %s356 = scalar_lea.sflag [#allocation13], %s355
        %s357 = sand.u32 %s196, 1
        %s358 = smul.addr %s357, 8
        %s359 = scalar_lea.vmem [#allocation19], %s358
        %p360 = scmp.eq.s32.totalorder %s34, 0
        // Predicated region
        $region61: #{tpu_custom_call.1} parent=43 // pred_check
          %p361 = pneg %p360
        $region62: #{tpu_custom_call.1} parent=43 // pred_check_branch
          %363 = sbr.rel (%p361) target = $region64
        $region63: #{tpu_custom_call.1} parent=43 // pred_region
          %v364 = vld [vmem:[%s309] sm:$0xff]
          %v365 = vld [vmem:[#allocation16] sm:$0xff]
          %v366 = vld [vmem:[#allocation16 + $0x8] sm:$0xff]
          %v367 = vld [vmem:[#allocation16 + $0x10] sm:$0xff]
          %v368 = vld [vmem:[#allocation16 + $0x18] sm:$0xff]
          %v369 = vld [vmem:[%s4] sm:$0x1]
          %v371 = vlaneseq
          %v372 = vshrl.u32 %v371, 7
          %v373 = vsub.s32 0, %v372
          %v374 = vrot.slane %v369, %v373
          %vm376 = vcmask 261120
          %v378 = vsel %vm376, %v364, 0
          %380 = vmatprep.subr.mxu0 0.0
          %381 = vmatpush1.msra.mxu0 %v365
          %382 = vmatprep.subr.mxu0 0.0
          %383 = vmatpush1.msra.mxu0 %v366
          %384 = vmatprep.subr.mxu0 0.0
          %385 = vmatpush1.msra.mxu0 %v367
          %386 = vmatprep.subr.mxu0 0.0
          %387 = vmatpush1.msra.mxu0 %v368
          %388 = vmatprep.subr.mxu0 0.0
          %389 = vmatpush1.msra.mxu0 0.0
          %390 = vmatprep.subr.mxu0 0.0
          %391 = vmatpush1.msra.mxu0 0.0
          %392 = vmatprep.subr.mxu0 0.0
          %393 = vmatpush1.msra.mxu0 0.0
          %394 = vmatprep.subr.mxu0 0.0
          %395 = vmatpush1.msra.mxu0 0.0
          %396 = vmatprep.subr.mxu0 0.0
          %397 = vmatpush1.msra.mxu0 0.0
          %398 = vmatprep.subr.mxu0 0.0
          %399 = vmatpush1.msra.mxu0 0.0
          %400 = vmatprep.subr.mxu0 0.0
          %401 = vmatpush1.msra.mxu0 0.0
          %402 = vmatprep.subr.mxu0 0.0
          %403 = vmatpush1.msra.mxu0 0.0
          %404 = vmatprep.subr.mxu0 0.0
          %405 = vmatpush1.msra.mxu0 0.0
          %406 = vmatprep.subr.mxu0 0.0
          %407 = vmatpush1.msra.mxu0 0.0
          %408 = vmatprep.subr.mxu0 0.0
          %409 = vmatpush1.msra.mxu0 0.0
          %410 = vmatprep.subr.mxu0 0.0
          %411 = vmatpush1.msra.mxu0 0.0
          %412 = vmatprep.subr.mxu0 0.0
          %413 = vmatpush1.msra.mxu0 0.0
          %414 = vmatprep.subr.mxu0 0.0
          %415 = vmatpush1.msra.mxu0 0.0
          %416 = vmatprep.subr.mxu0 0.0
          %417 = vmatpush1.msra.mxu0 0.0
          %418 = vmatprep.subr.mxu0 0.0
          %419 = vmatpush1.msra.mxu0 0.0
          %420 = vmatprep.subr.mxu0 0.0
          %421 = vmatpush1.msra.mxu0 0.0
          %422 = vmatprep.subr.mxu0 0.0
          %423 = vmatpush1.msra.mxu0 0.0
          %424 = vmatprep.subr.mxu0 0.0
          %425 = vmatpush1.msra.mxu0 0.0
          %426 = vmatprep.subr.mxu0 0.0
          %427 = vmatpush1.msra.mxu0 0.0
          %428 = vmatprep.subr.mxu0 0.0
          %429 = vmatpush1.msra.mxu0 0.0
          %430 = vmatprep.subr.mxu0 0.0
          %431 = vmatpush1.msra.mxu0 0.0
          %432 = vmatprep.subr.mxu0 0.0
          %433 = vmatpush1.msra.mxu0 0.0
          %434 = vmatprep.subr.mxu0 0.0
          %435 = vmatpush1.msra.mxu0 0.0
          %436 = vmatprep.subr.mxu0 0.0
          %437 = vmatpush1.msra.mxu0 0.0
          %438 = vmatprep.subr.mxu0 0.0
          %439 = vmatpush1.msra.mxu0 0.0
          %440 = vmatprep.subr.mxu0 0.0
          %441 = vmatpush1.msra.mxu0 0.0
          %442 = vmatprep.subr.mxu0 0.0
          %443 = vmatpush1.msra.mxu0 0.0
          %444 = vmatprep.mubr.f32.mxu0 0.0
          %445 = vmatmul.mubr.f32.gmra.mrb[0].mxu0 %v378
          %v446 = vpop.f32.mrb[0].mxu0
          %v447 = vadd.f32 %v374, %v446
          %v448 = vpop.f32.mrb[0].mxu0
          %449 = vdwg.mxu0
          %450 = vst.msk [vmem:[#allocation2] sm:$0xff] %vm376, %v447
          %vm451 = vcmask 64512
          %452 = vst.msk [vmem:[#allocation3] sm:$0xff] %vm451, 0.0
          %vm453 = vcmask 7168
          %454 = vst.msk [vmem:[#allocation7] sm:$0xff] %vm453, 0.0
          %455 = vst.msk [vmem:[#allocation4] sm:$0xff] %vm451, 0.0
          %456 = vst.msk [vmem:[#allocation8] sm:$0xff] %vm453, 0.0
          %457 = vst.msk [vmem:[#allocation5] sm:$0xff] %vm451, 0.0
          %458 = vst.msk [vmem:[#allocation9] sm:$0xff] %vm453, 0.0
          %459 = vst.msk [vmem:[#allocation6] sm:$0xff] %vm451, 0.0
          %460 = vst.msk [vmem:[#allocation10] sm:$0xff] %vm453, 0.0
        $region64: #{tpu_custom_call.1} parent=43 // pred_fallthru
          _
        %v461 = vld [vmem:[%s318] sm:$0xff]
        %v462 = vld [vmem:[#allocation17] sm:$0xff]
        %v463 = vld [vmem:[#allocation17 + $0x8] sm:$0xff]
        %v464 = vld [vmem:[#allocation17 + $0x10] sm:$0xff]
        %v465 = vld [vmem:[#allocation17 + $0x18] sm:$0xff]
        %v466 = vld [vmem:[%s5] sm:$0x1]
        %v468 = vlaneseq
        %v469 = vshrl.u32 %v468, 7
        %v470 = vsub.s32 0, %v469
        %v471 = vrot.slane %v466, %v470
        %vm473 = vcmask 261120
        %v475 = vsel %vm473, %v461, 0
        %477 = vmatprep.subr.mxu0 0.0
        %478 = vmatpush1.msra.mxu0 %v462
        %479 = vmatprep.subr.mxu0 0.0
        %480 = vmatpush1.msra.mxu0 %v463
        %481 = vmatprep.subr.mxu0 0.0
        %482 = vmatpush1.msra.mxu0 %v464
        %483 = vmatprep.subr.mxu0 0.0
        %484 = vmatpush1.msra.mxu0 %v465
        %485 = vmatprep.subr.mxu0 0.0
        %486 = vmatpush1.msra.mxu0 0.0
        %487 = vmatprep.subr.mxu0 0.0
        %488 = vmatpush1.msra.mxu0 0.0
        %489 = vmatprep.subr.mxu0 0.0
        %490 = vmatpush1.msra.mxu0 0.0
        %491 = vmatprep.subr.mxu0 0.0
        %492 = vmatpush1.msra.mxu0 0.0
        %493 = vmatprep.subr.mxu0 0.0
        %494 = vmatpush1.msra.mxu0 0.0
        %495 = vmatprep.subr.mxu0 0.0
        %496 = vmatpush1.msra.mxu0 0.0
        %497 = vmatprep.subr.mxu0 0.0
        %498 = vmatpush1.msra.mxu0 0.0
        %499 = vmatprep.subr.mxu0 0.0
        %500 = vmatpush1.msra.mxu0 0.0
        %501 = vmatprep.subr.mxu0 0.0
        %502 = vmatpush1.msra.mxu0 0.0
        %503 = vmatprep.subr.mxu0 0.0
        %504 = vmatpush1.msra.mxu0 0.0
        %505 = vmatprep.subr.mxu0 0.0
        %506 = vmatpush1.msra.mxu0 0.0
        %507 = vmatprep.subr.mxu0 0.0
        %508 = vmatpush1.msra.mxu0 0.0
        %509 = vmatprep.subr.mxu0 0.0
        %510 = vmatpush1.msra.mxu0 0.0
        %511 = vmatprep.subr.mxu0 0.0
        %512 = vmatpush1.msra.mxu0 0.0
        %513 = vmatprep.subr.mxu0 0.0
        %514 = vmatpush1.msra.mxu0 0.0
        %515 = vmatprep.subr.mxu0 0.0
        %516 = vmatpush1.msra.mxu0 0.0
        %517 = vmatprep.subr.mxu0 0.0
        %518 = vmatpush1.msra.mxu0 0.0
        %519 = vmatprep.subr.mxu0 0.0
        %520 = vmatpush1.msra.mxu0 0.0
        %521 = vmatprep.subr.mxu0 0.0
        %522 = vmatpush1.msra.mxu0 0.0
        %523 = vmatprep.subr.mxu0 0.0
        %524 = vmatpush1.msra.mxu0 0.0
        %525 = vmatprep.subr.mxu0 0.0
        %526 = vmatpush1.msra.mxu0 0.0
        %527 = vmatprep.subr.mxu0 0.0
        %528 = vmatpush1.msra.mxu0 0.0
        %529 = vmatprep.subr.mxu0 0.0
        %530 = vmatpush1.msra.mxu0 0.0
        %531 = vmatprep.subr.mxu0 0.0
        %532 = vmatpush1.msra.mxu0 0.0
        %533 = vmatprep.subr.mxu0 0.0
        %534 = vmatpush1.msra.mxu0 0.0
        %535 = vmatprep.subr.mxu0 0.0
        %536 = vmatpush1.msra.mxu0 0.0
        %537 = vmatprep.subr.mxu0 0.0
        %538 = vmatpush1.msra.mxu0 0.0
        %539 = vmatprep.subr.mxu0 0.0
        %540 = vmatpush1.msra.mxu0 0.0
        %541 = vmatprep.mubr.f32.mxu0 0.0
        %542 = vmatmul.mubr.f32.gmra.mrb[0].mxu0 %v475
        %v543 = vpop.f32.mrb[0].mxu0
        %v544 = vadd.f32 %v471, %v543
        %v545 = vpop.f32.mrb[0].mxu0
        %546 = vdwg.mxu0
        %v547 = vld [vmem:[#allocation2] sm:$0xff]
        %vm548 = vcmask 64512
        %v550 = vsel %vm548, %v547, 0
        %v553 = vsel %vm548, %v544, 0
        %555 = vmatprep.subr.mxu0 0.0
        %556 = vmatpush1.xpose.msra.mxu0 %v553
        %557 = vmatprep.subr.mxu0 0.0
        %558 = vmatpush1.xpose.msra.mxu0 0.0
        %559 = vmatprep.subr.mxu0 0.0
        %560 = vmatpush1.xpose.msra.mxu0 0.0
        %561 = vmatprep.subr.mxu0 0.0
        %562 = vmatpush1.xpose.msra.mxu0 0.0
        %563 = vmatprep.subr.mxu0 0.0
        %564 = vmatpush1.xpose.msra.mxu0 0.0
        %565 = vmatprep.subr.mxu0 0.0
        %566 = vmatpush1.xpose.msra.mxu0 0.0
        %567 = vmatprep.subr.mxu0 0.0
        %568 = vmatpush1.xpose.msra.mxu0 0.0
        %569 = vmatprep.subr.mxu0 0.0
        %570 = vmatpush1.xpose.msra.mxu0 0.0
        %571 = vmatprep.subr.mxu0 0.0
        %572 = vmatpush1.xpose.msra.mxu0 0.0
        %573 = vmatprep.subr.mxu0 0.0
        %574 = vmatpush1.xpose.msra.mxu0 0.0
        %575 = vmatprep.subr.mxu0 0.0
        %576 = vmatpush1.xpose.msra.mxu0 0.0
        %577 = vmatprep.subr.mxu0 0.0
        %578 = vmatpush1.xpose.msra.mxu0 0.0
        %579 = vmatprep.subr.mxu0 0.0
        %580 = vmatpush1.xpose.msra.mxu0 0.0
        %581 = vmatprep.subr.mxu0 0.0
        %582 = vmatpush1.xpose.msra.mxu0 0.0
        %583 = vmatprep.subr.mxu0 0.0
        %584 = vmatpush1.xpose.msra.mxu0 0.0
        %585 = vmatprep.subr.mxu0 0.0
        %586 = vmatpush1.xpose.msra.mxu0 0.0
        %587 = vmatprep.subr.mxu0 0.0
        %588 = vmatpush1.xpose.msra.mxu0 0.0
        %589 = vmatprep.subr.mxu0 0.0
        %590 = vmatpush1.xpose.msra.mxu0 0.0
        %591 = vmatprep.subr.mxu0 0.0
        %592 = vmatpush1.xpose.msra.mxu0 0.0
        %593 = vmatprep.subr.mxu0 0.0
        %594 = vmatpush1.xpose.msra.mxu0 0.0
        %595 = vmatprep.subr.mxu0 0.0
        %596 = vmatpush1.xpose.msra.mxu0 0.0
        %597 = vmatprep.subr.mxu0 0.0
        %598 = vmatpush1.xpose.msra.mxu0 0.0
        %599 = vmatprep.subr.mxu0 0.0
        %600 = vmatpush1.xpose.msra.mxu0 0.0
        %601 = vmatprep.subr.mxu0 0.0
        %602 = vmatpush1.xpose.msra.mxu0 0.0
        %603 = vmatprep.subr.mxu0 0.0
        %604 = vmatpush1.xpose.msra.mxu0 0.0
        %605 = vmatprep.subr.mxu0 0.0
        %606 = vmatpush1.xpose.msra.mxu0 0.0
        %607 = vmatprep.subr.mxu0 0.0
        %608 = vmatpush1.xpose.msra.mxu0 0.0
        %609 = vmatprep.subr.mxu0 0.0
        %610 = vmatpush1.xpose.msra.mxu0 0.0
        %611 = vmatprep.subr.mxu0 0.0
        %612 = vmatpush1.xpose.msra.mxu0 0.0
        %613 = vmatprep.subr.mxu0 0.0
        %614 = vmatpush1.xpose.msra.mxu0 0.0
        %615 = vmatprep.subr.mxu0 0.0
        %616 = vmatpush1.xpose.msra.mxu0 0.0
        %617 = vmatprep.subr.mxu0 0.0
        %618 = vmatpush1.xpose.msra.mxu0 0.0
        %619 = vmatprep.mubr.f32.mxu0 0.0
        %620 = vmatmul.mubr.f32.gmra.mrb[0].mxu0 %v550
        %v621 = vpop.f32.mrb[0].mxu0
        %v622 = vadd.f32 0.0, %v621
        %v623 = vpop.f32.mrb[0].mxu0
        %624 = vdwg.mxu0
        %v625 = vmul.f32 %v622, 1.442695
        %v626 = vpow.pop %v625
        %v627 = vld [vmem:[#allocation7] sm:$0xff]
        %v628 = vsel %vm548, %v626, 0.0
        %629 = vadd.xlane.f32.xlu0 %v628
        %v630 = vpop.xlane.xlu0 %629
        %v631 = vadd.f32 %v627, %v630
        %vm632 = vcmask 7168
        %633 = vst.msk [vmem:[#allocation7] sm:$0xff] %vm632, %v631
        %v634 = vld [vmem:[#allocation3] sm:$0xff]
        %635 = vrot.lane.b32.xlu0 %v544, 96
        %v636 = vpop.permute.xlu0 %635
        %v639 = vsel %vm548, %v626, 0
        %641 = vmatprep.subr.mxu0 0.0
        %642 = vmatpush1.msra.mxu0 %v636
        %643 = vmatprep.subr.mxu0 0.0
        %644 = vmatpush1.msra.mxu0 0.0
        %645 = vmatprep.subr.mxu0 0.0
        %646 = vmatpush1.msra.mxu0 0.0
        %647 = vmatprep.subr.mxu0 0.0
        %648 = vmatpush1.msra.mxu0 0.0
        %649 = vmatprep.subr.mxu0 0.0
        %650 = vmatpush1.msra.mxu0 0.0
        %651 = vmatprep.subr.mxu0 0.0
        %652 = vmatpush1.msra.mxu0 0.0
        %653 = vmatprep.subr.mxu0 0.0
        %654 = vmatpush1.msra.mxu0 0.0
        %655 = vmatprep.subr.mxu0 0.0
        %656 = vmatpush1.msra.mxu0 0.0
        %657 = vmatprep.subr.mxu0 0.0
        %658 = vmatpush1.msra.mxu0 0.0
        %659 = vmatprep.subr.mxu0 0.0
        %660 = vmatpush1.msra.mxu0 0.0
        %661 = vmatprep.subr.mxu0 0.0
        %662 = vmatpush1.msra.mxu0 0.0
        %663 = vmatprep.subr.mxu0 0.0
        %664 = vmatpush1.msra.mxu0 0.0
        %665 = vmatprep.subr.mxu0 0.0
        %666 = vmatpush1.msra.mxu0 0.0
        %667 = vmatprep.subr.mxu0 0.0
        %668 = vmatpush1.msra.mxu0 0.0
        %669 = vmatprep.subr.mxu0 0.0
        %670 = vmatpush1.msra.mxu0 0.0
        %671 = vmatprep.subr.mxu0 0.0
        %672 = vmatpush1.msra.mxu0 0.0
        %673 = vmatprep.subr.mxu0 0.0
        %674 = vmatpush1.msra.mxu0 0.0
        %675 = vmatprep.subr.mxu0 0.0
        %676 = vmatpush1.msra.mxu0 0.0
        %677 = vmatprep.subr.mxu0 0.0
        %678 = vmatpush1.msra.mxu0 0.0
        %679 = vmatprep.subr.mxu0 0.0
        %680 = vmatpush1.msra.mxu0 0.0
        %681 = vmatprep.subr.mxu0 0.0
        %682 = vmatpush1.msra.mxu0 0.0
        %683 = vmatprep.subr.mxu0 0.0
        %684 = vmatpush1.msra.mxu0 0.0
        %685 = vmatprep.subr.mxu0 0.0
        %686 = vmatpush1.msra.mxu0 0.0
        %687 = vmatprep.subr.mxu0 0.0
        %688 = vmatpush1.msra.mxu0 0.0
        %689 = vmatprep.subr.mxu0 0.0
        %690 = vmatpush1.msra.mxu0 0.0
        %691 = vmatprep.subr.mxu0 0.0
        %692 = vmatpush1.msra.mxu0 0.0
        %693 = vmatprep.subr.mxu0 0.0
        %694 = vmatpush1.msra.mxu0 0.0
        %695 = vmatprep.subr.mxu0 0.0
        %696 = vmatpush1.msra.mxu0 0.0
        %697 = vmatprep.subr.mxu0 0.0
        %698 = vmatpush1.msra.mxu0 0.0
        %699 = vmatprep.subr.mxu0 0.0
        %700 = vmatpush1.msra.mxu0 0.0
        %701 = vmatprep.subr.mxu0 0.0
        %702 = vmatpush1.msra.mxu0 0.0
        %703 = vmatprep.subr.mxu0 0.0
        %704 = vmatpush1.msra.mxu0 0.0
        %705 = vmatprep.mubr.f32.mxu0 0.0
        %706 = vmatmul.mubr.f32.gmra.mrb[0].mxu0 %v639
        %v707 = vpop.f32.mrb[0].mxu0
        %v708 = vadd.f32 0.0, %v707
        %v709 = vpop.f32.mrb[0].mxu0
        %710 = vdwg.mxu0
        %v711 = vadd.f32 %v634, %v708
        %712 = vst.msk [vmem:[#allocation3] sm:$0xff] %vm548, %v711
        %713 = vrot.lane.b32.xlu0 %v547, 120
        %v714 = vpop.permute.xlu0 %713
        %715 = vrot.lane.b32.xlu0 %v544, 120
        %v716 = vpop.permute.xlu0 %715
        %v717 = vsel %vm548, %v714, 0
        %v719 = vsel %vm548, %v716, 0
        %721 = vmatprep.subr.mxu0 0.0
        %722 = vmatpush1.xpose.msra.mxu0 %v719
        %723 = vmatprep.subr.mxu0 0.0
        %724 = vmatpush1.xpose.msra.mxu0 0.0
        %725 = vmatprep.subr.mxu0 0.0
        %726 = vmatpush1.xpose.msra.mxu0 0.0
        %727 = vmatprep.subr.mxu0 0.0
        %728 = vmatpush1.xpose.msra.mxu0 0.0
        %729 = vmatprep.subr.mxu0 0.0
        %730 = vmatpush1.xpose.msra.mxu0 0.0
        %731 = vmatprep.subr.mxu0 0.0
        %732 = vmatpush1.xpose.msra.mxu0 0.0
        %733 = vmatprep.subr.mxu0 0.0
        %734 = vmatpush1.xpose.msra.mxu0 0.0
        %735 = vmatprep.subr.mxu0 0.0
        %736 = vmatpush1.xpose.msra.mxu0 0.0
        %737 = vmatprep.subr.mxu0 0.0
        %738 = vmatpush1.xpose.msra.mxu0 0.0
        %739 = vmatprep.subr.mxu0 0.0
        %740 = vmatpush1.xpose.msra.mxu0 0.0
        %741 = vmatprep.subr.mxu0 0.0
        %742 = vmatpush1.xpose.msra.mxu0 0.0
        %743 = vmatprep.subr.mxu0 0.0
        %744 = vmatpush1.xpose.msra.mxu0 0.0
        %745 = vmatprep.subr.mxu0 0.0
        %746 = vmatpush1.xpose.msra.mxu0 0.0
        %747 = vmatprep.subr.mxu0 0.0
        %748 = vmatpush1.xpose.msra.mxu0 0.0
        %749 = vmatprep.subr.mxu0 0.0
        %750 = vmatpush1.xpose.msra.mxu0 0.0
        %751 = vmatprep.subr.mxu0 0.0
        %752 = vmatpush1.xpose.msra.mxu0 0.0
        %753 = vmatprep.subr.mxu0 0.0
        %754 = vmatpush1.xpose.msra.mxu0 0.0
        %755 = vmatprep.subr.mxu0 0.0
        %756 = vmatpush1.xpose.msra.mxu0 0.0
        %757 = vmatprep.subr.mxu0 0.0
        %758 = vmatpush1.xpose.msra.mxu0 0.0
        %759 = vmatprep.subr.mxu0 0.0
        %760 = vmatpush1.xpose.msra.mxu0 0.0
        %761 = vmatprep.subr.mxu0 0.0
        %762 = vmatpush1.xpose.msra.mxu0 0.0
        %763 = vmatprep.subr.mxu0 0.0
        %764 = vmatpush1.xpose.msra.mxu0 0.0
        %765 = vmatprep.subr.mxu0 0.0
        %766 = vmatpush1.xpose.msra.mxu0 0.0
        %767 = vmatprep.subr.mxu0 0.0
        %768 = vmatpush1.xpose.msra.mxu0 0.0
        %769 = vmatprep.subr.mxu0 0.0
        %770 = vmatpush1.xpose.msra.mxu0 0.0
        %771 = vmatprep.subr.mxu0 0.0
        %772 = vmatpush1.xpose.msra.mxu0 0.0
        %773 = vmatprep.subr.mxu0 0.0
        %774 = vmatpush1.xpose.msra.mxu0 0.0
        %775 = vmatprep.subr.mxu0 0.0
        %776 = vmatpush1.xpose.msra.mxu0 0.0
        %777 = vmatprep.subr.mxu0 0.0
        %778 = vmatpush1.xpose.msra.mxu0 0.0
        %779 = vmatprep.subr.mxu0 0.0
        %780 = vmatpush1.xpose.msra.mxu0 0.0
        %781 = vmatprep.subr.mxu0 0.0
        %782 = vmatpush1.xpose.msra.mxu0 0.0
        %783 = vmatprep.subr.mxu0 0.0
        %784 = vmatpush1.xpose.msra.mxu0 0.0
        %785 = vmatprep.mubr.f32.mxu0 0.0
        %786 = vmatmul.mubr.f32.gmra.mrb[0].mxu0 %v717
        %v787 = vpop.f32.mrb[0].mxu0
        %v788 = vadd.f32 0.0, %v787
        %v789 = vpop.f32.mrb[0].mxu0
        %790 = vdwg.mxu0
        %v791 = vmul.f32 %v788, 1.442695
        %v792 = vpow.pop %v791
        %v793 = vld [vmem:[#allocation8] sm:$0xff]
        %v794 = vsel %vm548, %v792, 0.0
        %795 = vadd.xlane.f32.xlu0 %v794
        %v796 = vpop.xlane.xlu0 %795
        %v797 = vadd.f32 %v793, %v796
        %798 = vst.msk [vmem:[#allocation8] sm:$0xff] %vm632, %v797
        %v799 = vld [vmem:[#allocation4] sm:$0xff]
        %800 = vrot.lane.b32.xlu0 %v544, 88
        %v801 = vpop.permute.xlu0 %800
        %v804 = vsel %vm548, %v792, 0
        %806 = vmatprep.subr.mxu0 0.0
        %807 = vmatpush1.msra.mxu0 %v801
        %808 = vmatprep.subr.mxu0 0.0
        %809 = vmatpush1.msra.mxu0 0.0
        %810 = vmatprep.subr.mxu0 0.0
        %811 = vmatpush1.msra.mxu0 0.0
        %812 = vmatprep.subr.mxu0 0.0
        %813 = vmatpush1.msra.mxu0 0.0
        %814 = vmatprep.subr.mxu0 0.0
        %815 = vmatpush1.msra.mxu0 0.0
        %816 = vmatprep.subr.mxu0 0.0
        %817 = vmatpush1.msra.mxu0 0.0
        %818 = vmatprep.subr.mxu0 0.0
        %819 = vmatpush1.msra.mxu0 0.0
        %820 = vmatprep.subr.mxu0 0.0
        %821 = vmatpush1.msra.mxu0 0.0
        %822 = vmatprep.subr.mxu0 0.0
        %823 = vmatpush1.msra.mxu0 0.0
        %824 = vmatprep.subr.mxu0 0.0
        %825 = vmatpush1.msra.mxu0 0.0
        %826 = vmatprep.subr.mxu0 0.0
        %827 = vmatpush1.msra.mxu0 0.0
        %828 = vmatprep.subr.mxu0 0.0
        %829 = vmatpush1.msra.mxu0 0.0
        %830 = vmatprep.subr.mxu0 0.0
        %831 = vmatpush1.msra.mxu0 0.0
        %832 = vmatprep.subr.mxu0 0.0
        %833 = vmatpush1.msra.mxu0 0.0
        %834 = vmatprep.subr.mxu0 0.0
        %835 = vmatpush1.msra.mxu0 0.0
        %836 = vmatprep.subr.mxu0 0.0
        %837 = vmatpush1.msra.mxu0 0.0
        %838 = vmatprep.subr.mxu0 0.0
        %839 = vmatpush1.msra.mxu0 0.0
        %840 = vmatprep.subr.mxu0 0.0
        %841 = vmatpush1.msra.mxu0 0.0
        %842 = vmatprep.subr.mxu0 0.0
        %843 = vmatpush1.msra.mxu0 0.0
        %844 = vmatprep.subr.mxu0 0.0
        %845 = vmatpush1.msra.mxu0 0.0
        %846 = vmatprep.subr.mxu0 0.0
        %847 = vmatpush1.msra.mxu0 0.0
        %848 = vmatprep.subr.mxu0 0.0
        %849 = vmatpush1.msra.mxu0 0.0
        %850 = vmatprep.subr.mxu0 0.0
        %851 = vmatpush1.msra.mxu0 0.0
        %852 = vmatprep.subr.mxu0 0.0
        %853 = vmatpush1.msra.mxu0 0.0
        %854 = vmatprep.subr.mxu0 0.0
        %855 = vmatpush1.msra.mxu0 0.0
        %856 = vmatprep.subr.mxu0 0.0
        %857 = vmatpush1.msra.mxu0 0.0
        %858 = vmatprep.subr.mxu0 0.0
        %859 = vmatpush1.msra.mxu0 0.0
        %860 = vmatprep.subr.mxu0 0.0
        %861 = vmatpush1.msra.mxu0 0.0
        %862 = vmatprep.subr.mxu0 0.0
        %863 = vmatpush1.msra.mxu0 0.0
        %864 = vmatprep.subr.mxu0 0.0
        %865 = vmatpush1.msra.mxu0 0.0
        %866 = vmatprep.subr.mxu0 0.0
        %867 = vmatpush1.msra.mxu0 0.0
        %868 = vmatprep.subr.mxu0 0.0
        %869 = vmatpush1.msra.mxu0 0.0
        %870 = vmatprep.mubr.f32.mxu0 0.0
        %871 = vmatmul.mubr.f32.gmra.mrb[0].mxu0 %v804
        %v872 = vpop.f32.mrb[0].mxu0
        %v873 = vadd.f32 0.0, %v872
        %v874 = vpop.f32.mrb[0].mxu0
        %875 = vdwg.mxu0
        %v876 = vadd.f32 %v799, %v873
        %877 = vst.msk [vmem:[#allocation4] sm:$0xff] %vm548, %v876
        %878 = vrot.lane.b32.xlu0 %v547, 112
        %v879 = vpop.permute.xlu0 %878
        %880 = vrot.lane.b32.xlu0 %v544, 112
        %v881 = vpop.permute.xlu0 %880
        %v882 = vsel %vm548, %v879, 0
        %v884 = vsel %vm548, %v881, 0
        %886 = vmatprep.subr.mxu0 0.0
        %887 = vmatpush1.xpose.msra.mxu0 %v884
        %888 = vmatprep.subr.mxu0 0.0
        %889 = vmatpush1.xpose.msra.mxu0 0.0
        %890 = vmatprep.subr.mxu0 0.0
        %891 = vmatpush1.xpose.msra.mxu0 0.0
        %892 = vmatprep.subr.mxu0 0.0
        %893 = vmatpush1.xpose.msra.mxu0 0.0
        %894 = vmatprep.subr.mxu0 0.0
        %895 = vmatpush1.xpose.msra.mxu0 0.0
        %896 = vmatprep.subr.mxu0 0.0
        %897 = vmatpush1.xpose.msra.mxu0 0.0
        %898 = vmatprep.subr.mxu0 0.0
        %899 = vmatpush1.xpose.msra.mxu0 0.0
        %900 = vmatprep.subr.mxu0 0.0
        %901 = vmatpush1.xpose.msra.mxu0 0.0
        %902 = vmatprep.subr.mxu0 0.0
        %903 = vmatpush1.xpose.msra.mxu0 0.0
        %904 = vmatprep.subr.mxu0 0.0
        %905 = vmatpush1.xpose.msra.mxu0 0.0
        %906 = vmatprep.subr.mxu0 0.0
        %907 = vmatpush1.xpose.msra.mxu0 0.0
        %908 = vmatprep.subr.mxu0 0.0
        %909 = vmatpush1.xpose.msra.mxu0 0.0
        %910 = vmatprep.subr.mxu0 0.0
        %911 = vmatpush1.xpose.msra.mxu0 0.0
        %912 = vmatprep.subr.mxu0 0.0
        %913 = vmatpush1.xpose.msra.mxu0 0.0
        %914 = vmatprep.subr.mxu0 0.0
        %915 = vmatpush1.xpose.msra.mxu0 0.0
        %916 = vmatprep.subr.mxu0 0.0
        %917 = vmatpush1.xpose.msra.mxu0 0.0
        %918 = vmatprep.subr.mxu0 0.0
        %919 = vmatpush1.xpose.msra.mxu0 0.0
        %920 = vmatprep.subr.mxu0 0.0
        %921 = vmatpush1.xpose.msra.mxu0 0.0
        %922 = vmatprep.subr.mxu0 0.0
        %923 = vmatpush1.xpose.msra.mxu0 0.0
        %924 = vmatprep.subr.mxu0 0.0
        %925 = vmatpush1.xpose.msra.mxu0 0.0
        %926 = vmatprep.subr.mxu0 0.0
        %927 = vmatpush1.xpose.msra.mxu0 0.0
        %928 = vmatprep.subr.mxu0 0.0
        %929 = vmatpush1.xpose.msra.mxu0 0.0
        %930 = vmatprep.subr.mxu0 0.0
        %931 = vmatpush1.xpose.msra.mxu0 0.0
        %932 = vmatprep.subr.mxu0 0.0
        %933 = vmatpush1.xpose.msra.mxu0 0.0
        %934 = vmatprep.subr.mxu0 0.0
        %935 = vmatpush1.xpose.msra.mxu0 0.0
        %936 = vmatprep.subr.mxu0 0.0
        %937 = vmatpush1.xpose.msra.mxu0 0.0
        %938 = vmatprep.subr.mxu0 0.0
        %939 = vmatpush1.xpose.msra.mxu0 0.0
        %940 = vmatprep.subr.mxu0 0.0
        %941 = vmatpush1.xpose.msra.mxu0 0.0
        %942 = vmatprep.subr.mxu0 0.0
        %943 = vmatpush1.xpose.msra.mxu0 0.0
        %944 = vmatprep.subr.mxu0 0.0
        %945 = vmatpush1.xpose.msra.mxu0 0.0
        %946 = vmatprep.subr.mxu0 0.0
        %947 = vmatpush1.xpose.msra.mxu0 0.0
        %948 = vmatprep.subr.mxu0 0.0
        %949 = vmatpush1.xpose.msra.mxu0 0.0
        %950 = vmatprep.mubr.f32.mxu0 0.0
        %951 = vmatmul.mubr.f32.gmra.mrb[0].mxu0 %v882
        %v952 = vpop.f32.mrb[0].mxu0
        %v953 = vadd.f32 0.0, %v952
        %v954 = vpop.f32.mrb[0].mxu0
        %955 = vdwg.mxu0
        %v956 = vmul.f32 %v953, 1.442695
        %v957 = vpow.pop %v956
        %v958 = vld [vmem:[#allocation9] sm:$0xff]
        %v959 = vsel %vm548, %v957, 0.0
        %960 = vadd.xlane.f32.xlu0 %v959
        %v961 = vpop.xlane.xlu0 %960
        %v962 = vadd.f32 %v958, %v961
        %963 = vst.msk [vmem:[#allocation9] sm:$0xff] %vm632, %v962
        %v964 = vld [vmem:[#allocation5] sm:$0xff]
        %965 = vrot.lane.b32.xlu0 %v544, 80
        %v966 = vpop.permute.xlu0 %965
        %v969 = vsel %vm548, %v957, 0
        %971 = vmatprep.subr.mxu0 0.0
        %972 = vmatpush1.msra.mxu0 %v966
        %973 = vmatprep.subr.mxu0 0.0
        %974 = vmatpush1.msra.mxu0 0.0
        %975 = vmatprep.subr.mxu0 0.0
        %976 = vmatpush1.msra.mxu0 0.0
        %977 = vmatprep.subr.mxu0 0.0
        %978 = vmatpush1.msra.mxu0 0.0
        %979 = vmatprep.subr.mxu0 0.0
        %980 = vmatpush1.msra.mxu0 0.0
        %981 = vmatprep.subr.mxu0 0.0
        %982 = vmatpush1.msra.mxu0 0.0
        %983 = vmatprep.subr.mxu0 0.0
        %984 = vmatpush1.msra.mxu0 0.0
        %985 = vmatprep.subr.mxu0 0.0
        %986 = vmatpush1.msra.mxu0 0.0
        %987 = vmatprep.subr.mxu0 0.0
        %988 = vmatpush1.msra.mxu0 0.0
        %989 = vmatprep.subr.mxu0 0.0
        %990 = vmatpush1.msra.mxu0 0.0
        %991 = vmatprep.subr.mxu0 0.0
        %992 = vmatpush1.msra.mxu0 0.0
        %993 = vmatprep.subr.mxu0 0.0
        %994 = vmatpush1.msra.mxu0 0.0
        %995 = vmatprep.subr.mxu0 0.0
        %996 = vmatpush1.msra.mxu0 0.0
        %997 = vmatprep.subr.mxu0 0.0
        %998 = vmatpush1.msra.mxu0 0.0
        %999 = vmatprep.subr.mxu0 0.0
        %1000 = vmatpush1.msra.mxu0 0.0
        %1001 = vmatprep.subr.mxu0 0.0
        %1002 = vmatpush1.msra.mxu0 0.0
        %1003 = vmatprep.subr.mxu0 0.0
        %1004 = vmatpush1.msra.mxu0 0.0
        %1005 = vmatprep.subr.mxu0 0.0
        %1006 = vmatpush1.msra.mxu0 0.0
        %1007 = vmatprep.subr.mxu0 0.0
        %1008 = vmatpush1.msra.mxu0 0.0
        %1009 = vmatprep.subr.mxu0 0.0
        %1010 = vmatpush1.msra.mxu0 0.0
        %1011 = vmatprep.subr.mxu0 0.0
        %1012 = vmatpush1.msra.mxu0 0.0
        %1013 = vmatprep.subr.mxu0 0.0
        %1014 = vmatpush1.msra.mxu0 0.0
        %1015 = vmatprep.subr.mxu0 0.0
        %1016 = vmatpush1.msra.mxu0 0.0
        %1017 = vmatprep.subr.mxu0 0.0
        %1018 = vmatpush1.msra.mxu0 0.0
        %1019 = vmatprep.subr.mxu0 0.0
        %1020 = vmatpush1.msra.mxu0 0.0
        %1021 = vmatprep.subr.mxu0 0.0
        %1022 = vmatpush1.msra.mxu0 0.0
        %1023 = vmatprep.subr.mxu0 0.0
        %1024 = vmatpush1.msra.mxu0 0.0
        %1025 = vmatprep.subr.mxu0 0.0
        %1026 = vmatpush1.msra.mxu0 0.0
        %1027 = vmatprep.subr.mxu0 0.0
        %1028 = vmatpush1.msra.mxu0 0.0
        %1029 = vmatprep.subr.mxu0 0.0
        %1030 = vmatpush1.msra.mxu0 0.0
        %1031 = vmatprep.subr.mxu0 0.0
        %1032 = vmatpush1.msra.mxu0 0.0
        %1033 = vmatprep.subr.mxu0 0.0
        %1034 = vmatpush1.msra.mxu0 0.0
        %1035 = vmatprep.mubr.f32.mxu0 0.0
        %1036 = vmatmul.mubr.f32.gmra.mrb[0].mxu0 %v969
        %v1037 = vpop.f32.mrb[0].mxu0
        %v1038 = vadd.f32 0.0, %v1037
        %v1039 = vpop.f32.mrb[0].mxu0
        %1040 = vdwg.mxu0
        %v1041 = vadd.f32 %v964, %v1038
        %1042 = vst.msk [vmem:[#allocation5] sm:$0xff] %vm548, %v1041
        %1043 = vrot.lane.b32.xlu0 %v547, 104
        %v1044 = vpop.permute.xlu0 %1043
        %1045 = vrot.lane.b32.xlu0 %v544, 104
        %v1046 = vpop.permute.xlu0 %1045
        %v1047 = vsel %vm548, %v1044, 0
        %v1049 = vsel %vm548, %v1046, 0
        %1051 = vmatprep.subr.mxu0 0.0
        %1052 = vmatpush1.xpose.msra.mxu0 %v1049
        %1053 = vmatprep.subr.mxu0 0.0
        %1054 = vmatpush1.xpose.msra.mxu0 0.0
        %1055 = vmatprep.subr.mxu0 0.0
        %1056 = vmatpush1.xpose.msra.mxu0 0.0
        %1057 = vmatprep.subr.mxu0 0.0
        %1058 = vmatpush1.xpose.msra.mxu0 0.0
        %1059 = vmatprep.subr.mxu0 0.0
        %1060 = vmatpush1.xpose.msra.mxu0 0.0
        %1061 = vmatprep.subr.mxu0 0.0
        %1062 = vmatpush1.xpose.msra.mxu0 0.0
        %1063 = vmatprep.subr.mxu0 0.0
        %1064 = vmatpush1.xpose.msra.mxu0 0.0
        %1065 = vmatprep.subr.mxu0 0.0
        %1066 = vmatpush1.xpose.msra.mxu0 0.0
        %1067 = vmatprep.subr.mxu0 0.0
        %1068 = vmatpush1.xpose.msra.mxu0 0.0
        %1069 = vmatprep.subr.mxu0 0.0
        %1070 = vmatpush1.xpose.msra.mxu0 0.0
        %1071 = vmatprep.subr.mxu0 0.0
        %1072 = vmatpush1.xpose.msra.mxu0 0.0
        %1073 = vmatprep.subr.mxu0 0.0
        %1074 = vmatpush1.xpose.msra.mxu0 0.0
        %1075 = vmatprep.subr.mxu0 0.0
        %1076 = vmatpush1.xpose.msra.mxu0 0.0
        %1077 = vmatprep.subr.mxu0 0.0
        %1078 = vmatpush1.xpose.msra.mxu0 0.0
        %1079 = vmatprep.subr.mxu0 0.0
        %1080 = vmatpush1.xpose.msra.mxu0 0.0
        %1081 = vmatprep.subr.mxu0 0.0
        %1082 = vmatpush1.xpose.msra.mxu0 0.0
        %1083 = vmatprep.subr.mxu0 0.0
        %1084 = vmatpush1.xpose.msra.mxu0 0.0
        %1085 = vmatprep.subr.mxu0 0.0
        %1086 = vmatpush1.xpose.msra.mxu0 0.0
        %1087 = vmatprep.subr.mxu0 0.0
        %1088 = vmatpush1.xpose.msra.mxu0 0.0
        %1089 = vmatprep.subr.mxu0 0.0
        %1090 = vmatpush1.xpose.msra.mxu0 0.0
        %1091 = vmatprep.subr.mxu0 0.0
        %1092 = vmatpush1.xpose.msra.mxu0 0.0
        %1093 = vmatprep.subr.mxu0 0.0
        %1094 = vmatpush1.xpose.msra.mxu0 0.0
        %1095 = vmatprep.subr.mxu0 0.0
        %1096 = vmatpush1.xpose.msra.mxu0 0.0
        %1097 = vmatprep.subr.mxu0 0.0
        %1098 = vmatpush1.xpose.msra.mxu0 0.0
        %1099 = vmatprep.subr.mxu0 0.0
        %1100 = vmatpush1.xpose.msra.mxu0 0.0
        %1101 = vmatprep.subr.mxu0 0.0
        %1102 = vmatpush1.xpose.msra.mxu0 0.0
        %1103 = vmatprep.subr.mxu0 0.0
        %1104 = vmatpush1.xpose.msra.mxu0 0.0
        %1105 = vmatprep.subr.mxu0 0.0
        %1106 = vmatpush1.xpose.msra.mxu0 0.0
        %1107 = vmatprep.subr.mxu0 0.0
        %1108 = vmatpush1.xpose.msra.mxu0 0.0
        %1109 = vmatprep.subr.mxu0 0.0
        %1110 = vmatpush1.xpose.msra.mxu0 0.0
        %1111 = vmatprep.subr.mxu0 0.0
        %1112 = vmatpush1.xpose.msra.mxu0 0.0
        %1113 = vmatprep.subr.mxu0 0.0
        %1114 = vmatpush1.xpose.msra.mxu0 0.0
        %1115 = vmatprep.mubr.f32.mxu0 0.0
        %1116 = vmatmul.mubr.f32.gmra.mrb[0].mxu0 %v1047
        %v1117 = vpop.f32.mrb[0].mxu0
        %v1118 = vadd.f32 0.0, %v1117
        %v1119 = vpop.f32.mrb[0].mxu0
        %1120 = vdwg.mxu0
        %v1121 = vmul.f32 %v1118, 1.442695
        %v1122 = vpow.pop %v1121
        %v1123 = vld [vmem:[#allocation10] sm:$0xff]
        %v1124 = vsel %vm548, %v1122, 0.0
        %1125 = vadd.xlane.f32.xlu0 %v1124
        %v1126 = vpop.xlane.xlu0 %1125
        %v1127 = vadd.f32 %v1123, %v1126
        %1128 = vst.msk [vmem:[#allocation10] sm:$0xff] %vm632, %v1127
        %v1129 = vld [vmem:[#allocation6] sm:$0xff]
        %1130 = vrot.lane.b32.xlu0 %v544, 72
        %v1131 = vpop.permute.xlu0 %1130
        %v1134 = vsel %vm548, %v1122, 0
        %1136 = vmatprep.subr.mxu0 0.0
        %1137 = vmatpush1.msra.mxu0 %v1131
        %1138 = vmatprep.subr.mxu0 0.0
        %1139 = vmatpush1.msra.mxu0 0.0
        %1140 = vmatprep.subr.mxu0 0.0
        %1141 = vmatpush1.msra.mxu0 0.0
        %1142 = vmatprep.subr.mxu0 0.0
        %1143 = vmatpush1.msra.mxu0 0.0
        %1144 = vmatprep.subr.mxu0 0.0
        %1145 = vmatpush1.msra.mxu0 0.0
        %1146 = vmatprep.subr.mxu0 0.0
        %1147 = vmatpush1.msra.mxu0 0.0
        %1148 = vmatprep.subr.mxu0 0.0
        %1149 = vmatpush1.msra.mxu0 0.0
        %1150 = vmatprep.subr.mxu0 0.0
        %1151 = vmatpush1.msra.mxu0 0.0
        %1152 = vmatprep.subr.mxu0 0.0
        %1153 = vmatpush1.msra.mxu0 0.0
        %1154 = vmatprep.subr.mxu0 0.0
        %1155 = vmatpush1.msra.mxu0 0.0
        %1156 = vmatprep.subr.mxu0 0.0
        %1157 = vmatpush1.msra.mxu0 0.0
        %1158 = vmatprep.subr.mxu0 0.0
        %1159 = vmatpush1.msra.mxu0 0.0
        %1160 = vmatprep.subr.mxu0 0.0
        %1161 = vmatpush1.msra.mxu0 0.0
        %1162 = vmatprep.subr.mxu0 0.0
        %1163 = vmatpush1.msra.mxu0 0.0
        %1164 = vmatprep.subr.mxu0 0.0
        %1165 = vmatpush1.msra.mxu0 0.0
        %1166 = vmatprep.subr.mxu0 0.0
        %1167 = vmatpush1.msra.mxu0 0.0
        %1168 = vmatprep.subr.mxu0 0.0
        %1169 = vmatpush1.msra.mxu0 0.0
        %1170 = vmatprep.subr.mxu0 0.0
        %1171 = vmatpush1.msra.mxu0 0.0
        %1172 = vmatprep.subr.mxu0 0.0
        %1173 = vmatpush1.msra.mxu0 0.0
        %1174 = vmatprep.subr.mxu0 0.0
        %1175 = vmatpush1.msra.mxu0 0.0
        %1176 = vmatprep.subr.mxu0 0.0
        %1177 = vmatpush1.msra.mxu0 0.0
        %1178 = vmatprep.subr.mxu0 0.0
        %1179 = vmatpush1.msra.mxu0 0.0
        %1180 = vmatprep.subr.mxu0 0.0
        %1181 = vmatpush1.msra.mxu0 0.0
        %1182 = vmatprep.subr.mxu0 0.0
        %1183 = vmatpush1.msra.mxu0 0.0
        %1184 = vmatprep.subr.mxu0 0.0
        %1185 = vmatpush1.msra.mxu0 0.0
        %1186 = vmatprep.subr.mxu0 0.0
        %1187 = vmatpush1.msra.mxu0 0.0
        %1188 = vmatprep.subr.mxu0 0.0
        %1189 = vmatpush1.msra.mxu0 0.0
        %1190 = vmatprep.subr.mxu0 0.0
        %1191 = vmatpush1.msra.mxu0 0.0
        %1192 = vmatprep.subr.mxu0 0.0
        %1193 = vmatpush1.msra.mxu0 0.0
        %1194 = vmatprep.subr.mxu0 0.0
        %1195 = vmatpush1.msra.mxu0 0.0
        %1196 = vmatprep.subr.mxu0 0.0
        %1197 = vmatpush1.msra.mxu0 0.0
        %1198 = vmatprep.subr.mxu0 0.0
        %1199 = vmatpush1.msra.mxu0 0.0
        %1200 = vmatprep.mubr.f32.mxu0 0.0
        %1201 = vmatmul.mubr.f32.gmra.mrb[0].mxu0 %v1134
        %v1202 = vpop.f32.mrb[0].mxu0
        %v1203 = vadd.f32 0.0, %v1202
        %v1204 = vpop.f32.mrb[0].mxu0
        %1205 = vdwg.mxu0
        %v1206 = vadd.f32 %v1129, %v1203
        %1207 = vst.msk [vmem:[#allocation6] sm:$0xff] %vm548, %v1206
        // Predicated region
        $region65: #{tpu_custom_call.1} parent=43 // pred_check
          %p1208 = pneg %p360
        $region66: #{tpu_custom_call.1} parent=43 // pred_check_branch
          %1210 = sbr.rel (%p1208) target = $region68
        $region67: #{tpu_custom_call.1} parent=43 // pred_region
          %v1211 = vld [vmem:[#allocation7] sm:$0xff]
          %v1212 = vadd.f32 %v1211, 1e-08
          %v1213 = vrcp.pop %v1212
          %v1214 = vld [vmem:[#allocation3] sm:$0xff]
          %1216 = vset.pattern.permute.xlu0 0
          %1217 = vperm.xlu0 %1216, %v1213
          %v1218 = vpop.permute.xlu0 %1217
          %v1220 = vmul.f32 %v1214, %v1218
          %1221 = vst.msk [vmem:[%s359] sm:$0xff] %vm548, %v1220
          %v1222 = vld [vmem:[#allocation8] sm:$0xff]
          %v1223 = vadd.f32 %v1222, 1e-08
          %v1224 = vrcp.pop %v1223
          %v1225 = vld [vmem:[#allocation4] sm:$0xff]
          %1227 = vset.pattern.permute.xlu0 0
          %1228 = vperm.xlu0 %1227, %v1224
          %v1229 = vpop.permute.xlu0 %1228
          %v1231 = vmul.f32 %v1225, %v1229
          %1233 = vrot.lane.b32.xlu0 %v1231, 8
          %v1234 = vpop.permute.xlu0 %1233
          %vm1236 = vcmask 130112
          %1237 = vst.msk [vmem:[%s359] sm:$0xff] %vm1236, %v1234
          %v1238 = vld [vmem:[#allocation9] sm:$0xff]
          %v1239 = vadd.f32 %v1238, 1e-08
          %v1240 = vrcp.pop %v1239
          %v1241 = vld [vmem:[#allocation5] sm:$0xff]
          %1243 = vset.pattern.permute.xlu0 0
          %1244 = vperm.xlu0 %1243, %v1240
          %v1245 = vpop.permute.xlu0 %1244
          %v1247 = vmul.f32 %v1241, %v1245
          %1249 = vrot.lane.b32.xlu0 %v1247, 16
          %v1250 = vpop.permute.xlu0 %1249
          %vm1252 = vcmask 195712
          %1253 = vst.msk [vmem:[%s359] sm:$0xff] %vm1252, %v1250
          %v1254 = vld [vmem:[#allocation10] sm:$0xff]
          %v1255 = vadd.f32 %v1254, 1e-08
          %v1256 = vrcp.pop %v1255
          %v1257 = vld [vmem:[#allocation6] sm:$0xff]
          %1259 = vset.pattern.permute.xlu0 0
          %1260 = vperm.xlu0 %1259, %v1256
          %v1261 = vpop.permute.xlu0 %1260
          %v1263 = vmul.f32 %v1257, %v1261
          %1265 = vrot.lane.b32.xlu0 %v1263, 24
          %v1266 = vpop.permute.xlu0 %1265
          %vm1268 = vcmask 261312
          %1269 = vst.msk [vmem:[%s359] sm:$0xff] %vm1268, %v1266
        $region68: #{tpu_custom_call.1} parent=43 // pred_fallthru
          _
        %s1270 = sand.u32 %s196, 1
        %s1271 = scalar_lea.sflag [#allocation13], %s1270
        %s1272 = sand.u32 %s196, 1
        %s1273 = smul.addr %s1272, 8
        %s1274 = scalar_lea.vmem [#allocation19], %s1273
        // Predicated region
        $region69: #{tpu_custom_call.1} parent=43 // pred_check
          %p1275 = pneg %p206
        $region70: #{tpu_custom_call.1} parent=43 // pred_check_branch
          %1277 = sbr.rel (%p1275) target = $region72
        $region71: #{tpu_custom_call.1} parent=43 // pred_region
          %s1279 = ssub.s32 128, 128
          %1280 = vsyncadd %s1271, %s1279
          %s1281 = sadd.s32 %s33, %s32
          %s1282 = smul.addr %s1281, 128
          %s1283 = scalar_lea.hbm %s6, %s1282
          %s1285 = sshll.u32 %s1274, 4
          %s1286 = int_to_ptr.vmem [resolvable:$true] %s1285
          %1288 = dma.vmem_to_hbm [thread:$0]  %s1286, 128, %s1283, %s1271
        $region72: #{tpu_custom_call.1} parent=43 // pred_fallthru
          _
      $region44: #{tpu_custom_call.1} parent=5 // pred_fallthru
        _
      %p1289 = scmp.le.s32.totalorder 2, %s22
      // Predicated region
      $region73: #{tpu_custom_call.1} parent=5 // pred_check
        %p1290 = pneg %p1289
      $region74: #{tpu_custom_call.1} parent=5 // pred_check_branch
        %1292 = sbr.rel (%p1290) target = $region76
      $region75: #{tpu_custom_call.1} parent=5 // pred_region
        %s1293 = ssub.s32 %s22, 2
        // Predicated region
        $region77: #{tpu_custom_call.1} parent=75 // pred_check
          %p1294 = pneg %p212
        $region78: #{tpu_custom_call.1} parent=75 // pred_check_branch
          %1296 = sbr.rel (%p1294) target = $region80
        $region79: #{tpu_custom_call.1} parent=75 // pred_region
          %s1297 = sand.u32 %s197, 1
          %s1298 = scalar_lea.sflag [#allocation13], %s1297
          %s1299 = sand.u32 %s197, 1
          %s1300 = smul.addr %s1299, 8
          %s1301 = scalar_lea.vmem [#allocation19], %s1300
          %1302 = dma.done %s1298, 128
        $region80: #{tpu_custom_call.1} parent=75 // pred_fallthru
          _
      $region76: #{tpu_custom_call.1} parent=5 // pred_fallthru
        _
    $region6: #{tpu_custom_call.1} parent=1 // loop_footer
      %s26 = sadd.s32 1, %s22
    $region7: #{tpu_custom_call.1} parent=1 // loop_footer_branch
      %21 = sbr.rel target = $region3
    $region8: #{tpu_custom_call.1} parent=1 // loop_exit
      _
    %1303 = vsyncpa [#allocation12], 1
    %s1304 = scalar_lea.sflag [#allocation12], 1
    %1305 = vsyncpa %s1304, 1
    %1306 = vsyncpa [#allocation15], 1
    %s1307 = scalar_lea.sflag [#allocation15], 1
    %1308 = vsyncpa %s1307, 1
    %1309 = vsyncpa [#allocation18], 1
    %1310 = vsyncpa [#allocation13], 1
    %s1311 = scalar_lea.sflag [#allocation13], 1
    %1312 = vsyncpa %s1311, 1

</llo_original>
